<compile_context>
chip_gen: v6e
topology: v6e:2x2x1
jax: 0.10.0
libtpu: 0.0.40
codegen_flags: <defaults>
</compile_context>

<pallas_src>
import jax
import jax.numpy as jnp
from jax import lax
from jax.experimental import pallas as pl
from jax.experimental.pallas import tpu as pltpu


def unified_kernel(x_ref, h0_ref, c0_ref,
                   wphiT_ref, bphi_ref,
                   wihT_ref, bgates_ref,
                   whhT_ref,
                   wprojT_ref, bproj_ref,
                   wattn_ref, battn_ref,
                   wfcT_ref, bfc_ref,
                   logits_ref, hout_ref, cout_ref,
                   gx_ref, h_all_ref):
    """Single-invocation kernel: batched pointwise conv + batched LSTM input
    projection, serial LSTM recurrence, then batched projection / attention
    pooling / classifier — everything resident in VMEM."""
    T, B, H4 = gx_ref.shape
    H = h0_ref.shape[-1]

    # ---- batched, non-recurrent precompute: phi (1x1 conv + ReLU) and the
    # ---- LSTM input-side gate projection over all T*B rows at once. --------
    feat = jnp.maximum(
        jnp.dot(x_ref[...], wphiT_ref[...],
                preferred_element_type=jnp.float32) + bphi_ref[...],
        0.0)                                                      # (T*B, F)
    gates_x = (jnp.dot(feat, wihT_ref[...],
                       preferred_element_type=jnp.float32)
               + bgates_ref[...])                                 # (T*B, 4H)
    gx_ref[...] = gates_x.reshape(T, B, H4)

    whhT = whhT_ref[...]                                          # (H, 4H)

    # ---- serial LSTM recurrence: only h @ W_hh^T + nonlinearities ----------
    def step(t, carry):
        h, c = carry
        gates = gx_ref[t] + jnp.dot(h, whhT,
                                    preferred_element_type=jnp.float32)
        sg = jax.nn.sigmoid(gates)                                # full-width
        tg = jnp.tanh(gates)                                      # full-width
        i_t = sg[:, 0 * H:1 * H]
        f_t = sg[:, 1 * H:2 * H]
        g_t = tg[:, 2 * H:3 * H]
        o_t = sg[:, 3 * H:4 * H]
        c = f_t * c + i_t * g_t
        h = o_t * jnp.tanh(c)
        h_all_ref[t] = h
        return h, c

    h_fin, c_fin = lax.fori_loop(0, T, step,
                                 (h0_ref[...], c0_ref[...]),
                                 unroll=True)

    # ---- batched projection + attention pooling + classifier ---------------
    h_flat = h_all_ref[...].reshape(T * B, H)
    proj = (jnp.dot(h_flat, wprojT_ref[...],
                    preferred_element_type=jnp.float32)
            + bproj_ref[...])                                     # (T*B, H)
    scores = (jnp.sum(proj * wattn_ref[...], axis=1, keepdims=True)
              + battn_ref[...])                                   # (T*B, 1)
    scores = scores.reshape(T, B, 1)
    scores = scores - jnp.max(scores, axis=0, keepdims=True)      # time axis
    e = jnp.exp(scores)
    w = e * pl.reciprocal(jnp.sum(e, axis=0, keepdims=True), approx=True)
    attended = jnp.sum(w * proj.reshape(T, B, H), axis=0)         # (B, H)

    logits_ref[...] = (jnp.dot(attended, wfcT_ref[...],
                               preferred_element_type=jnp.float32)
                       + bfc_ref[...])                            # (B, Cpad)
    hout_ref[...] = h_fin
    cout_ref[...] = c_fin


def init_params(key, n_mels, feat_dim, hidden, num_classes):
    ks = jax.random.split(key, 6)

    def lin(k, out_d, in_d):
        w = jax.random.normal(k, (out_d, in_d), jnp.float32) / jnp.sqrt(
            jnp.float32(in_d))
        b = jnp.zeros((out_d,), jnp.float32)
        return w, b

    wphi, bphi = lin(ks[0], feat_dim, n_mels)        # phi: Conv1d 1x1
    wih, bih = lin(ks[1], 4 * hidden, feat_dim)      # LSTM input weights
    whh, bhh = lin(ks[2], 4 * hidden, hidden)        # LSTM hidden weights
    wproj, bproj = lin(ks[3], hidden, hidden)        # projection
    wattn, battn = lin(ks[4], 1, hidden)             # attention scorer
    wfc, bfc = lin(ks[5], num_classes, hidden)       # classifier
    return dict(wphi=wphi, bphi=bphi, wih=wih, bih=bih, whh=whh, bhh=bhh,
                wproj=wproj, bproj=bproj, wattn=wattn, battn=battn,
                wfc=wfc, bfc=bfc)


def unified_forward(x, params, hidden_dim=32, h0=None, c0=None):
    """x: (B, n_mel_bins, T) float32 spectrogram.
    Returns (logits (B, C), h_n (1, B, H), c_n (1, B, H))."""
    B, M, T = x.shape
    H = hidden_dim
    C = params['wfc'].shape[0]
    if h0 is None:
        h0 = jnp.zeros((1, B, H), jnp.float32)
    if c0 is None:
        c0 = jnp.zeros((1, B, H), jnp.float32)

    # Pad batch up to a multiple of 8 so every vreg sublane / MXU row is used.
    Bp = max(8, ((B + 7) // 8) * 8)
    pad_b = Bp - B
    xp = jnp.pad(x, ((0, pad_b), (0, 0), (0, 0)))
    h0p = jnp.pad(h0[0], ((0, pad_b), (0, 0)))
    c0p = jnp.pad(c0[0], ((0, pad_b), (0, 0)))

    # (B, M, T) -> (T, B, M) -> (T*B, M): single slab for batched matmuls.
    x2d = jnp.transpose(xp, (2, 0, 1)).reshape(T * Bp, M)

    # Lane-dense classifier output: pad weight/bias columns to 128 lanes.
    Cpad = ((C + 127) // 128) * 128
    wfcT_pad = jnp.zeros((H, Cpad), jnp.float32).at[:, :C].set(params['wfc'].T)
    bfc_pad = jnp.zeros((1, Cpad), jnp.float32).at[:, :C].set(params['bfc'])

    # Fold the two gate biases once (b_ih + b_hh).
    bgates = (params['bih'] + params['bhh'])[None, :]

    args = (
        x2d, h0p, c0p,
        params['wphi'].T, params['bphi'][None, :],
        params['wih'].T, bgates,
        params['whh'].T,
        params['wproj'].T, params['bproj'][None, :],
        params['wattn'], params['battn'][None, :],   # wattn kept as (1, H)
        wfcT_pad, bfc_pad,
    )

    vmem = pl.BlockSpec(memory_space=pltpu.MemorySpace.VMEM)
    out_shapes = (
        jax.ShapeDtypeStruct((Bp, Cpad), jnp.float32),
        jax.ShapeDtypeStruct((Bp, H), jnp.float32),
        jax.ShapeDtypeStruct((Bp, H), jnp.float32),
    )

    logits_pad, h_n, c_n = pl.pallas_call(
        unified_kernel,
        out_shape=out_shapes,
        in_specs=[vmem] * len(args),
        out_specs=(vmem, vmem, vmem),
        scratch_shapes=[
            pltpu.VMEM((T, Bp, 4 * H), jnp.float32),   # gates_x (input side)
            pltpu.VMEM((T, Bp, H), jnp.float32),       # h_t history
        ],
    )(*args)

    logits = logits_pad[:B, :C]
    return logits, h_n[None, :B, :], c_n[None, :B, :]


if __name__ == "__main__":
    key = jax.random.PRNGKey(0)
    kx, kp = jax.random.split(key)

    # Small shapes consistent with the module: batch=2, n_mel_bins=64,
    # time_steps=8, base_filters (feature_dim)=32, hidden_dim=32, classes=10.
    B, n_mels, T = 2, 64, 8
    feat_dim, hidden, num_classes = 32, 32, 10

    x = jax.random.normal(kx, (B, n_mels, T), jnp.float32)
    params = init_params(kp, n_mels, feat_dim, hidden, num_classes)

    logits, h_n, c_n = unified_forward(x, params, hidden_dim=hidden)
    jax.block_until_ready((logits, h_n, c_n))

    assert logits.shape == (B, num_classes)
    assert h_n.shape == (1, B, hidden)
    assert c_n.shape == (1, B, hidden)
    assert bool(jnp.all(jnp.isfinite(logits)))
    assert bool(jnp.all(jnp.isfinite(h_n)))
    assert bool(jnp.all(jnp.isfinite(c_n)))
    print("KERNEL_OK")
</pallas_src>

<mosaic_0001>
module attributes {stable_mosaic.version = 11 : i64} {
  func.func @unified_kernel(%arg0: memref<64x64xf32, #tpu.memory_space<vmem>>, %arg1: memref<8x32xf32, #tpu.memory_space<vmem>>, %arg2: memref<8x32xf32, #tpu.memory_space<vmem>>, %arg3: memref<64x32xf32, #tpu.memory_space<vmem>>, %arg4: memref<1x32xf32, #tpu.memory_space<vmem>>, %arg5: memref<32x128xf32, #tpu.memory_space<vmem>>, %arg6: memref<1x128xf32, #tpu.memory_space<vmem>>, %arg7: memref<32x128xf32, #tpu.memory_space<vmem>>, %arg8: memref<32x32xf32, #tpu.memory_space<vmem>>, %arg9: memref<1x32xf32, #tpu.memory_space<vmem>>, %arg10: memref<1x32xf32, #tpu.memory_space<vmem>>, %arg11: memref<1x1xf32, #tpu.memory_space<vmem>>, %arg12: memref<32x128xf32, #tpu.memory_space<vmem>>, %arg13: memref<1x128xf32, #tpu.memory_space<vmem>>, %arg14: memref<8x128xf32, #tpu.memory_space<vmem>>, %arg15: memref<8x32xf32, #tpu.memory_space<vmem>>, %arg16: memref<8x32xf32, #tpu.memory_space<vmem>>, %arg17: memref<8x8x128xf32, #tpu.memory_space<vmem>>, %arg18: memref<8x8x32xf32, #tpu.memory_space<vmem>>) attributes {dimension_semantics = [], scalar_prefetch = 0 : i64, scratch_operands = 2 : i64, tpu.core_type = #tpu.core_type<tc>} {
    %c0 = arith.constant 0 : index
    %c0_0 = arith.constant 0 : index
    %0 = vector.load %arg0[%c0, %c0_0] : memref<64x64xf32, #tpu.memory_space<vmem>>, vector<64x64xf32>
    %c0_1 = arith.constant 0 : index
    %c0_2 = arith.constant 0 : index
    %1 = vector.load %arg3[%c0_1, %c0_2] : memref<64x32xf32, #tpu.memory_space<vmem>>, vector<64x32xf32>
    %cst = arith.constant dense<0.000000e+00> : vector<64x32xf32>
    %2 = tpu.matmul %0, %1, %cst {dimension_numbers = #tpu.dot_dimension_numbers<[1], [0], [0], [1], [0, 0, 1, 1], [], []>} : vector<64x64xf32>, vector<64x32xf32>, vector<64x32xf32> -> vector<64x32xf32>
    %c0_3 = arith.constant 0 : index
    %c0_4 = arith.constant 0 : index
    %3 = vector.load %arg4[%c0_3, %c0_4] : memref<1x32xf32, #tpu.memory_space<vmem>>, vector<1x32xf32>
    %4 = vector.broadcast %3 : vector<1x32xf32> to vector<64x32xf32>
    %5 = arith.addf %2, %4 : vector<64x32xf32>
    %cst_5 = arith.constant 0.000000e+00 : f32
    %6 = vector.broadcast %cst_5 : f32 to vector<64x32xf32>
    %7 = arith.maximumf %5, %6 : vector<64x32xf32>
    %c0_6 = arith.constant 0 : index
    %c0_7 = arith.constant 0 : index
    %8 = vector.load %arg5[%c0_6, %c0_7] : memref<32x128xf32, #tpu.memory_space<vmem>>, vector<32x128xf32>
    %cst_8 = arith.constant dense<0.000000e+00> : vector<64x128xf32>
    %9 = tpu.matmul %7, %8, %cst_8 {dimension_numbers = #tpu.dot_dimension_numbers<[1], [0], [0], [1], [0, 0, 1, 1], [], []>} : vector<64x32xf32>, vector<32x128xf32>, vector<64x128xf32> -> vector<64x128xf32>
    %c0_9 = arith.constant 0 : index
    %c0_10 = arith.constant 0 : index
    %10 = vector.load %arg6[%c0_9, %c0_10] : memref<1x128xf32, #tpu.memory_space<vmem>>, vector<1x128xf32>
    %11 = vector.broadcast %10 : vector<1x128xf32> to vector<64x128xf32>
    %12 = arith.addf %9, %11 : vector<64x128xf32>
    %13 = vector.shape_cast %12 : vector<64x128xf32> to vector<8x8x128xf32>
    %c0_11 = arith.constant 0 : index
    %c0_12 = arith.constant 0 : index
    %c0_13 = arith.constant 0 : index
    %14 = vector.load %arg17[%c0_11, %c0_12, %c0_13] : memref<8x8x128xf32, #tpu.memory_space<vmem>>, vector<8x8x128xf32>
    tpu.vector_store %arg17[%c0_11, %c0_12, %c0_13], %13 {strides = array<i32>} : memref<8x8x128xf32, #tpu.memory_space<vmem>>, vector<8x8x128xf32>,
    %c0_14 = arith.constant 0 : index
    %c0_15 = arith.constant 0 : index
    %15 = vector.load %arg7[%c0_14, %c0_15] : memref<32x128xf32, #tpu.memory_space<vmem>>, vector<32x128xf32>
    %c0_16 = arith.constant 0 : index
    %c0_17 = arith.constant 0 : index
    %16 = vector.load %arg1[%c0_16, %c0_17] : memref<8x32xf32, #tpu.memory_space<vmem>>, vector<8x32xf32>
    %c0_18 = arith.constant 0 : index
    %c0_19 = arith.constant 0 : index
    %17 = vector.load %arg2[%c0_18, %c0_19] : memref<8x32xf32, #tpu.memory_space<vmem>>, vector<8x32xf32>
    %c0_i32 = arith.constant 0 : i32
    %18 = arith.index_cast %c0_i32 : i32 to index
    %c0_20 = arith.constant 0 : index
    %c0_21 = arith.constant 0 : index
    %19 = vector.load %arg17[%18, %c0_20, %c0_21] : memref<8x8x128xf32, #tpu.memory_space<vmem>>, vector<1x8x128xf32>
    %20 = vector.shape_cast %19 : vector<1x8x128xf32> to vector<8x128xf32>
    %cst_22 = arith.constant dense<0.000000e+00> : vector<8x128xf32>
    %21 = tpu.matmul %16, %15, %cst_22 {dimension_numbers = #tpu.dot_dimension_numbers<[1], [0], [0], [1], [0, 0, 1, 1], [], []>} : vector<8x32xf32>, vector<32x128xf32>, vector<8x128xf32> -> vector<8x128xf32>
    %22 = arith.addf %20, %21 : vector<8x128xf32>
    %23 = arith.negf %22 : vector<8x128xf32>
    %24 = math.exp %23 : vector<8x128xf32>
    %cst_23 = arith.constant 1.000000e+00 : f32
    %25 = vector.broadcast %cst_23 : f32 to vector<8x128xf32>
    %26 = arith.addf %25, %24 : vector<8x128xf32>
    %27 = arith.divf %25, %26 : vector<8x128xf32>
    %28 = math.tanh %22 : vector<8x128xf32>
    %29 = vector.extract_strided_slice %27 {offsets = [0, 0], sizes = [8, 32], strides = [1, 1]} : vector<8x128xf32> to vector<8x32xf32>
    %30 = vector.extract_strided_slice %27 {offsets = [0, 32], sizes = [8, 32], strides = [1, 1]} : vector<8x128xf32> to vector<8x32xf32>
    %31 = vector.extract_strided_slice %28 {offsets = [0, 64], sizes = [8, 32], strides = [1, 1]} : vector<8x128xf32> to vector<8x32xf32>
    %32 = vector.extract_strided_slice %27 {offsets = [0, 96], sizes = [8, 32], strides = [1, 1]} : vector<8x128xf32> to vector<8x32xf32>
    %33 = arith.mulf %30, %17 : vector<8x32xf32>
    %34 = arith.mulf %29, %31 : vector<8x32xf32>
    %35 = arith.addf %33, %34 : vector<8x32xf32>
    %36 = math.tanh %35 : vector<8x32xf32>
    %37 = arith.mulf %32, %36 : vector<8x32xf32>
    %38 = arith.index_cast %c0_i32 : i32 to index
    %c0_24 = arith.constant 0 : index
    %c0_25 = arith.constant 0 : index
    %39 = vector.load %arg18[%38, %c0_24, %c0_25] : memref<8x8x32xf32, #tpu.memory_space<vmem>>, vector<1x8x32xf32>
    %40 = vector.shape_cast %39 : vector<1x8x32xf32> to vector<8x32xf32>
    %41 = vector.shape_cast %37 : vector<8x32xf32> to vector<1x8x32xf32>
    tpu.vector_store %arg18[%38, %c0_24, %c0_25], %41 {strides = array<i32>} : memref<8x8x32xf32, #tpu.memory_space<vmem>>, vector<1x8x32xf32>,
    %c1_i32 = arith.constant 1 : i32
    %42 = arith.index_cast %c1_i32 : i32 to index
    %c0_26 = arith.constant 0 : index
    %c0_27 = arith.constant 0 : index
    %43 = vector.load %arg17[%42, %c0_26, %c0_27] : memref<8x8x128xf32, #tpu.memory_space<vmem>>, vector<1x8x128xf32>
    %44 = vector.shape_cast %43 : vector<1x8x128xf32> to vector<8x128xf32>
    %cst_28 = arith.constant dense<0.000000e+00> : vector<8x128xf32>
    %45 = tpu.matmul %37, %15, %cst_28 {dimension_numbers = #tpu.dot_dimension_numbers<[1], [0], [0], [1], [0, 0, 1, 1], [], []>} : vector<8x32xf32>, vector<32x128xf32>, vector<8x128xf32> -> vector<8x128xf32>
    %46 = arith.addf %44, %45 : vector<8x128xf32>
    %47 = arith.negf %46 : vector<8x128xf32>
    %48 = math.exp %47 : vector<8x128xf32>
    %cst_29 = arith.constant 1.000000e+00 : f32
    %49 = vector.broadcast %cst_29 : f32 to vector<8x128xf32>
    %50 = arith.addf %49, %48 : vector<8x128xf32>
    %51 = arith.divf %49, %50 : vector<8x128xf32>
    %52 = math.tanh %46 : vector<8x128xf32>
    %53 = vector.extract_strided_slice %51 {offsets = [0, 0], sizes = [8, 32], strides = [1, 1]} : vector<8x128xf32> to vector<8x32xf32>
    %54 = vector.extract_strided_slice %51 {offsets = [0, 32], sizes = [8, 32], strides = [1, 1]} : vector<8x128xf32> to vector<8x32xf32>
    %55 = vector.extract_strided_slice %52 {offsets = [0, 64], sizes = [8, 32], strides = [1, 1]} : vector<8x128xf32> to vector<8x32xf32>
    %56 = vector.extract_strided_slice %51 {offsets = [0, 96], sizes = [8, 32], strides = [1, 1]} : vector<8x128xf32> to vector<8x32xf32>
    %57 = arith.mulf %54, %35 : vector<8x32xf32>
    %58 = arith.mulf %53, %55 : vector<8x32xf32>
    %59 = arith.addf %57, %58 : vector<8x32xf32>
    %60 = math.tanh %59 : vector<8x32xf32>
    %61 = arith.mulf %56, %60 : vector<8x32xf32>
    %62 = arith.index_cast %c1_i32 : i32 to index
    %c0_30 = arith.constant 0 : index
    %c0_31 = arith.constant 0 : index
    %63 = vector.load %arg18[%62, %c0_30, %c0_31] : memref<8x8x32xf32, #tpu.memory_space<vmem>>, vector<1x8x32xf32>
    %64 = vector.shape_cast %63 : vector<1x8x32xf32> to vector<8x32xf32>
    %65 = vector.shape_cast %61 : vector<8x32xf32> to vector<1x8x32xf32>
    tpu.vector_store %arg18[%62, %c0_30, %c0_31], %65 {strides = array<i32>} : memref<8x8x32xf32, #tpu.memory_space<vmem>>, vector<1x8x32xf32>,
    %c2_i32 = arith.constant 2 : i32
    %66 = arith.index_cast %c2_i32 : i32 to index
    %c0_32 = arith.constant 0 : index
    %c0_33 = arith.constant 0 : index
    %67 = vector.load %arg17[%66, %c0_32, %c0_33] : memref<8x8x128xf32, #tpu.memory_space<vmem>>, vector<1x8x128xf32>
    %68 = vector.shape_cast %67 : vector<1x8x128xf32> to vector<8x128xf32>
    %cst_34 = arith.constant dense<0.000000e+00> : vector<8x128xf32>
    %69 = tpu.matmul %61, %15, %cst_34 {dimension_numbers = #tpu.dot_dimension_numbers<[1], [0], [0], [1], [0, 0, 1, 1], [], []>} : vector<8x32xf32>, vector<32x128xf32>, vector<8x128xf32> -> vector<8x128xf32>
    %70 = arith.addf %68, %69 : vector<8x128xf32>
    %71 = arith.negf %70 : vector<8x128xf32>
    %72 = math.exp %71 : vector<8x128xf32>
    %cst_35 = arith.constant 1.000000e+00 : f32
    %73 = vector.broadcast %cst_35 : f32 to vector<8x128xf32>
    %74 = arith.addf %73, %72 : vector<8x128xf32>
    %75 = arith.divf %73, %74 : vector<8x128xf32>
    %76 = math.tanh %70 : vector<8x128xf32>
    %77 = vector.extract_strided_slice %75 {offsets = [0, 0], sizes = [8, 32], strides = [1, 1]} : vector<8x128xf32> to vector<8x32xf32>
    %78 = vector.extract_strided_slice %75 {offsets = [0, 32], sizes = [8, 32], strides = [1, 1]} : vector<8x128xf32> to vector<8x32xf32>
    %79 = vector.extract_strided_slice %76 {offsets = [0, 64], sizes = [8, 32], strides = [1, 1]} : vector<8x128xf32> to vector<8x32xf32>
    %80 = vector.extract_strided_slice %75 {offsets = [0, 96], sizes = [8, 32], strides = [1, 1]} : vector<8x128xf32> to vector<8x32xf32>
    %81 = arith.mulf %78, %59 : vector<8x32xf32>
    %82 = arith.mulf %77, %79 : vector<8x32xf32>
    %83 = arith.addf %81, %82 : vector<8x32xf32>
    %84 = math.tanh %83 : vector<8x32xf32>
    %85 = arith.mulf %80, %84 : vector<8x32xf32>
    %86 = arith.index_cast %c2_i32 : i32 to index
    %c0_36 = arith.constant 0 : index
    %c0_37 = arith.constant 0 : index
    %87 = vector.load %arg18[%86, %c0_36, %c0_37] : memref<8x8x32xf32, #tpu.memory_space<vmem>>, vector<1x8x32xf32>
    %88 = vector.shape_cast %87 : vector<1x8x32xf32> to vector<8x32xf32>
    %89 = vector.shape_cast %85 : vector<8x32xf32> to vector<1x8x32xf32>
    tpu.vector_store %arg18[%86, %c0_36, %c0_37], %89 {strides = array<i32>} : memref<8x8x32xf32, #tpu.memory_space<vmem>>, vector<1x8x32xf32>,
    %c3_i32 = arith.constant 3 : i32
    %90 = arith.index_cast %c3_i32 : i32 to index
    %c0_38 = arith.constant 0 : index
    %c0_39 = arith.constant 0 : index
    %91 = vector.load %arg17[%90, %c0_38, %c0_39] : memref<8x8x128xf32, #tpu.memory_space<vmem>>, vector<1x8x128xf32>
    %92 = vector.shape_cast %91 : vector<1x8x128xf32> to vector<8x128xf32>
    %cst_40 = arith.constant dense<0.000000e+00> : vector<8x128xf32>
    %93 = tpu.matmul %85, %15, %cst_40 {dimension_numbers = #tpu.dot_dimension_numbers<[1], [0], [0], [1], [0, 0, 1, 1], [], []>} : vector<8x32xf32>, vector<32x128xf32>, vector<8x128xf32> -> vector<8x128xf32>
    %94 = arith.addf %92, %93 : vector<8x128xf32>
    %95 = arith.negf %94 : vector<8x128xf32>
    %96 = math.exp %95 : vector<8x128xf32>
    %cst_41 = arith.constant 1.000000e+00 : f32
    %97 = vector.broadcast %cst_41 : f32 to vector<8x128xf32>
    %98 = arith.addf %97, %96 : vector<8x128xf32>
    %99 = arith.divf %97, %98 : vector<8x128xf32>
    %100 = math.tanh %94 : vector<8x128xf32>
    %101 = vector.extract_strided_slice %99 {offsets = [0, 0], sizes = [8, 32], strides = [1, 1]} : vector<8x128xf32> to vector<8x32xf32>
    %102 = vector.extract_strided_slice %99 {offsets = [0, 32], sizes = [8, 32], strides = [1, 1]} : vector<8x128xf32> to vector<8x32xf32>
    %103 = vector.extract_strided_slice %100 {offsets = [0, 64], sizes = [8, 32], strides = [1, 1]} : vector<8x128xf32> to vector<8x32xf32>
    %104 = vector.extract_strided_slice %99 {offsets = [0, 96], sizes = [8, 32], strides = [1, 1]} : vector<8x128xf32> to vector<8x32xf32>
    %105 = arith.mulf %102, %83 : vector<8x32xf32>
    %106 = arith.mulf %101, %103 : vector<8x32xf32>
    %107 = arith.addf %105, %106 : vector<8x32xf32>
    %108 = math.tanh %107 : vector<8x32xf32>
    %109 = arith.mulf %104, %108 : vector<8x32xf32>
    %110 = arith.index_cast %c3_i32 : i32 to index
    %c0_42 = arith.constant 0 : index
    %c0_43 = arith.constant 0 : index
    %111 = vector.load %arg18[%110, %c0_42, %c0_43] : memref<8x8x32xf32, #tpu.memory_space<vmem>>, vector<1x8x32xf32>
    %112 = vector.shape_cast %111 : vector<1x8x32xf32> to vector<8x32xf32>
    %113 = vector.shape_cast %109 : vector<8x32xf32> to vector<1x8x32xf32>
    tpu.vector_store %arg18[%110, %c0_42, %c0_43], %113 {strides = array<i32>} : memref<8x8x32xf32, #tpu.memory_space<vmem>>, vector<1x8x32xf32>,
    %c4_i32 = arith.constant 4 : i32
    %114 = arith.index_cast %c4_i32 : i32 to index
    %c0_44 = arith.constant 0 : index
    %c0_45 = arith.constant 0 : index
    %115 = vector.load %arg17[%114, %c0_44, %c0_45] : memref<8x8x128xf32, #tpu.memory_space<vmem>>, vector<1x8x128xf32>
    %116 = vector.shape_cast %115 : vector<1x8x128xf32> to vector<8x128xf32>
    %cst_46 = arith.constant dense<0.000000e+00> : vector<8x128xf32>
    %117 = tpu.matmul %109, %15, %cst_46 {dimension_numbers = #tpu.dot_dimension_numbers<[1], [0], [0], [1], [0, 0, 1, 1], [], []>} : vector<8x32xf32>, vector<32x128xf32>, vector<8x128xf32> -> vector<8x128xf32>
    %118 = arith.addf %116, %117 : vector<8x128xf32>
    %119 = arith.negf %118 : vector<8x128xf32>
    %120 = math.exp %119 : vector<8x128xf32>
    %cst_47 = arith.constant 1.000000e+00 : f32
    %121 = vector.broadcast %cst_47 : f32 to vector<8x128xf32>
    %122 = arith.addf %121, %120 : vector<8x128xf32>
    %123 = arith.divf %121, %122 : vector<8x128xf32>
    %124 = math.tanh %118 : vector<8x128xf32>
    %125 = vector.extract_strided_slice %123 {offsets = [0, 0], sizes = [8, 32], strides = [1, 1]} : vector<8x128xf32> to vector<8x32xf32>
    %126 = vector.extract_strided_slice %123 {offsets = [0, 32], sizes = [8, 32], strides = [1, 1]} : vector<8x128xf32> to vector<8x32xf32>
    %127 = vector.extract_strided_slice %124 {offsets = [0, 64], sizes = [8, 32], strides = [1, 1]} : vector<8x128xf32> to vector<8x32xf32>
    %128 = vector.extract_strided_slice %123 {offsets = [0, 96], sizes = [8, 32], strides = [1, 1]} : vector<8x128xf32> to vector<8x32xf32>
    %129 = arith.mulf %126, %107 : vector<8x32xf32>
    %130 = arith.mulf %125, %127 : vector<8x32xf32>
    %131 = arith.addf %129, %130 : vector<8x32xf32>
    %132 = math.tanh %131 : vector<8x32xf32>
    %133 = arith.mulf %128, %132 : vector<8x32xf32>
    %134 = arith.index_cast %c4_i32 : i32 to index
    %c0_48 = arith.constant 0 : index
    %c0_49 = arith.constant 0 : index
    %135 = vector.load %arg18[%134, %c0_48, %c0_49] : memref<8x8x32xf32, #tpu.memory_space<vmem>>, vector<1x8x32xf32>
    %136 = vector.shape_cast %135 : vector<1x8x32xf32> to vector<8x32xf32>
    %137 = vector.shape_cast %133 : vector<8x32xf32> to vector<1x8x32xf32>
    tpu.vector_store %arg18[%134, %c0_48, %c0_49], %137 {strides = array<i32>} : memref<8x8x32xf32, #tpu.memory_space<vmem>>, vector<1x8x32xf32>,
    %c5_i32 = arith.constant 5 : i32
    %138 = arith.index_cast %c5_i32 : i32 to index
    %c0_50 = arith.constant 0 : index
    %c0_51 = arith.constant 0 : index
    %139 = vector.load %arg17[%138, %c0_50, %c0_51] : memref<8x8x128xf32, #tpu.memory_space<vmem>>, vector<1x8x128xf32>
    %140 = vector.shape_cast %139 : vector<1x8x128xf32> to vector<8x128xf32>
    %cst_52 = arith.constant dense<0.000000e+00> : vector<8x128xf32>
    %141 = tpu.matmul %133, %15, %cst_52 {dimension_numbers = #tpu.dot_dimension_numbers<[1], [0], [0], [1], [0, 0, 1, 1], [], []>} : vector<8x32xf32>, vector<32x128xf32>, vector<8x128xf32> -> vector<8x128xf32>
    %142 = arith.addf %140, %141 : vector<8x128xf32>
    %143 = arith.negf %142 : vector<8x128xf32>
    %144 = math.exp %143 : vector<8x128xf32>
    %cst_53 = arith.constant 1.000000e+00 : f32
    %145 = vector.broadcast %cst_53 : f32 to vector<8x128xf32>
    %146 = arith.addf %145, %144 : vector<8x128xf32>
    %147 = arith.divf %145, %146 : vector<8x128xf32>
    %148 = math.tanh %142 : vector<8x128xf32>
    %149 = vector.extract_strided_slice %147 {offsets = [0, 0], sizes = [8, 32], strides = [1, 1]} : vector<8x128xf32> to vector<8x32xf32>
    %150 = vector.extract_strided_slice %147 {offsets = [0, 32], sizes = [8, 32], strides = [1, 1]} : vector<8x128xf32> to vector<8x32xf32>
    %151 = vector.extract_strided_slice %148 {offsets = [0, 64], sizes = [8, 32], strides = [1, 1]} : vector<8x128xf32> to vector<8x32xf32>
    %152 = vector.extract_strided_slice %147 {offsets = [0, 96], sizes = [8, 32], strides = [1, 1]} : vector<8x128xf32> to vector<8x32xf32>
    %153 = arith.mulf %150, %131 : vector<8x32xf32>
    %154 = arith.mulf %149, %151 : vector<8x32xf32>
    %155 = arith.addf %153, %154 : vector<8x32xf32>
    %156 = math.tanh %155 : vector<8x32xf32>
    %157 = arith.mulf %152, %156 : vector<8x32xf32>
    %158 = arith.index_cast %c5_i32 : i32 to index
    %c0_54 = arith.constant 0 : index
    %c0_55 = arith.constant 0 : index
    %159 = vector.load %arg18[%158, %c0_54, %c0_55] : memref<8x8x32xf32, #tpu.memory_space<vmem>>, vector<1x8x32xf32>
    %160 = vector.shape_cast %159 : vector<1x8x32xf32> to vector<8x32xf32>
    %161 = vector.shape_cast %157 : vector<8x32xf32> to vector<1x8x32xf32>
    tpu.vector_store %arg18[%158, %c0_54, %c0_55], %161 {strides = array<i32>} : memref<8x8x32xf32, #tpu.memory_space<vmem>>, vector<1x8x32xf32>,
    %c6_i32 = arith.constant 6 : i32
    %162 = arith.index_cast %c6_i32 : i32 to index
    %c0_56 = arith.constant 0 : index
    %c0_57 = arith.constant 0 : index
    %163 = vector.load %arg17[%162, %c0_56, %c0_57] : memref<8x8x128xf32, #tpu.memory_space<vmem>>, vector<1x8x128xf32>
    %164 = vector.shape_cast %163 : vector<1x8x128xf32> to vector<8x128xf32>
    %cst_58 = arith.constant dense<0.000000e+00> : vector<8x128xf32>
    %165 = tpu.matmul %157, %15, %cst_58 {dimension_numbers = #tpu.dot_dimension_numbers<[1], [0], [0], [1], [0, 0, 1, 1], [], []>} : vector<8x32xf32>, vector<32x128xf32>, vector<8x128xf32> -> vector<8x128xf32>
    %166 = arith.addf %164, %165 : vector<8x128xf32>
    %167 = arith.negf %166 : vector<8x128xf32>
    %168 = math.exp %167 : vector<8x128xf32>
    %cst_59 = arith.constant 1.000000e+00 : f32
    %169 = vector.broadcast %cst_59 : f32 to vector<8x128xf32>
    %170 = arith.addf %169, %168 : vector<8x128xf32>
    %171 = arith.divf %169, %170 : vector<8x128xf32>
    %172 = math.tanh %166 : vector<8x128xf32>
    %173 = vector.extract_strided_slice %171 {offsets = [0, 0], sizes = [8, 32], strides = [1, 1]} : vector<8x128xf32> to vector<8x32xf32>
    %174 = vector.extract_strided_slice %171 {offsets = [0, 32], sizes = [8, 32], strides = [1, 1]} : vector<8x128xf32> to vector<8x32xf32>
    %175 = vector.extract_strided_slice %172 {offsets = [0, 64], sizes = [8, 32], strides = [1, 1]} : vector<8x128xf32> to vector<8x32xf32>
    %176 = vector.extract_strided_slice %171 {offsets = [0, 96], sizes = [8, 32], strides = [1, 1]} : vector<8x128xf32> to vector<8x32xf32>
    %177 = arith.mulf %174, %155 : vector<8x32xf32>
    %178 = arith.mulf %173, %175 : vector<8x32xf32>
    %179 = arith.addf %177, %178 : vector<8x32xf32>
    %180 = math.tanh %179 : vector<8x32xf32>
    %181 = arith.mulf %176, %180 : vector<8x32xf32>
    %182 = arith.index_cast %c6_i32 : i32 to index
    %c0_60 = arith.constant 0 : index
    %c0_61 = arith.constant 0 : index
    %183 = vector.load %arg18[%182, %c0_60, %c0_61] : memref<8x8x32xf32, #tpu.memory_space<vmem>>, vector<1x8x32xf32>
    %184 = vector.shape_cast %183 : vector<1x8x32xf32> to vector<8x32xf32>
    %185 = vector.shape_cast %181 : vector<8x32xf32> to vector<1x8x32xf32>
    tpu.vector_store %arg18[%182, %c0_60, %c0_61], %185 {strides = array<i32>} : memref<8x8x32xf32, #tpu.memory_space<vmem>>, vector<1x8x32xf32>,
    %c7_i32 = arith.constant 7 : i32
    %186 = arith.index_cast %c7_i32 : i32 to index
    %c0_62 = arith.constant 0 : index
    %c0_63 = arith.constant 0 : index
    %187 = vector.load %arg17[%186, %c0_62, %c0_63] : memref<8x8x128xf32, #tpu.memory_space<vmem>>, vector<1x8x128xf32>
    %188 = vector.shape_cast %187 : vector<1x8x128xf32> to vector<8x128xf32>
    %cst_64 = arith.constant dense<0.000000e+00> : vector<8x128xf32>
    %189 = tpu.matmul %181, %15, %cst_64 {dimension_numbers = #tpu.dot_dimension_numbers<[1], [0], [0], [1], [0, 0, 1, 1], [], []>} : vector<8x32xf32>, vector<32x128xf32>, vector<8x128xf32> -> vector<8x128xf32>
    %190 = arith.addf %188, %189 : vector<8x128xf32>
    %191 = arith.negf %190 : vector<8x128xf32>
    %192 = math.exp %191 : vector<8x128xf32>
    %cst_65 = arith.constant 1.000000e+00 : f32
    %193 = vector.broadcast %cst_65 : f32 to vector<8x128xf32>
    %194 = arith.addf %193, %192 : vector<8x128xf32>
    %195 = arith.divf %193, %194 : vector<8x128xf32>
    %196 = math.tanh %190 : vector<8x128xf32>
    %197 = vector.extract_strided_slice %195 {offsets = [0, 0], sizes = [8, 32], strides = [1, 1]} : vector<8x128xf32> to vector<8x32xf32>
    %198 = vector.extract_strided_slice %195 {offsets = [0, 32], sizes = [8, 32], strides = [1, 1]} : vector<8x128xf32> to vector<8x32xf32>
    %199 = vector.extract_strided_slice %196 {offsets = [0, 64], sizes = [8, 32], strides = [1, 1]} : vector<8x128xf32> to vector<8x32xf32>
    %200 = vector.extract_strided_slice %195 {offsets = [0, 96], sizes = [8, 32], strides = [1, 1]} : vector<8x128xf32> to vector<8x32xf32>
    %201 = arith.mulf %198, %179 : vector<8x32xf32>
    %202 = arith.mulf %197, %199 : vector<8x32xf32>
    %203 = arith.addf %201, %202 : vector<8x32xf32>
    %204 = math.tanh %203 : vector<8x32xf32>
    %205 = arith.mulf %200, %204 : vector<8x32xf32>
    %206 = arith.index_cast %c7_i32 : i32 to index
    %c0_66 = arith.constant 0 : index
    %c0_67 = arith.constant 0 : index
    %207 = vector.load %arg18[%206, %c0_66, %c0_67] : memref<8x8x32xf32, #tpu.memory_space<vmem>>, vector<1x8x32xf32>
    %208 = vector.shape_cast %207 : vector<1x8x32xf32> to vector<8x32xf32>
    %209 = vector.shape_cast %205 : vector<8x32xf32> to vector<1x8x32xf32>
    tpu.vector_store %arg18[%206, %c0_66, %c0_67], %209 {strides = array<i32>} : memref<8x8x32xf32, #tpu.memory_space<vmem>>, vector<1x8x32xf32>,
    %c8_i32 = arith.constant 8 : i32
    %c0_68 = arith.constant 0 : index
    %c0_69 = arith.constant 0 : index
    %c0_70 = arith.constant 0 : index
    %210 = vector.load %arg18[%c0_68, %c0_69, %c0_70] : memref<8x8x32xf32, #tpu.memory_space<vmem>>, vector<8x8x32xf32>
    %211 = vector.shape_cast %210 : vector<8x8x32xf32> to vector<64x32xf32>
    %c0_71 = arith.constant 0 : index
    %c0_72 = arith.constant 0 : index
    %212 = vector.load %arg8[%c0_71, %c0_72] : memref<32x32xf32, #tpu.memory_space<vmem>>, vector<32x32xf32>
    %cst_73 = arith.constant dense<0.000000e+00> : vector<64x32xf32>
    %213 = tpu.matmul %211, %212, %cst_73 {dimension_numbers = #tpu.dot_dimension_numbers<[1], [0], [0], [1], [0, 0, 1, 1], [], []>} : vector<64x32xf32>, vector<32x32xf32>, vector<64x32xf32> -> vector<64x32xf32>
    %c0_74 = arith.constant 0 : index
    %c0_75 = arith.constant 0 : index
    %214 = vector.load %arg9[%c0_74, %c0_75] : memref<1x32xf32, #tpu.memory_space<vmem>>, vector<1x32xf32>
    %215 = vector.broadcast %214 : vector<1x32xf32> to vector<64x32xf32>
    %216 = arith.addf %213, %215 : vector<64x32xf32>
    %c0_76 = arith.constant 0 : index
    %c0_77 = arith.constant 0 : index
    %217 = vector.load %arg10[%c0_76, %c0_77] : memref<1x32xf32, #tpu.memory_space<vmem>>, vector<1x32xf32>
    %218 = vector.broadcast %217 : vector<1x32xf32> to vector<64x32xf32>
    %219 = arith.mulf %216, %218 : vector<64x32xf32>
    %cst_78 = arith.constant dense<0.000000e+00> : vector<64xf32>
    %220 = vector.multi_reduction <add>, %219, %cst_78 [1] : vector<64x32xf32> to vector<64xf32>
    %221 = vector.shape_cast %220 : vector<64xf32> to vector<64x1xf32>
    %c0_79 = arith.constant 0 : index
    %c0_80 = arith.constant 0 : index
    %222 = vector.load %arg11[%c0_79, %c0_80] : memref<1x1xf32, #tpu.memory_space<vmem>>, vector<1x1xf32>
    %223 = vector.broadcast %222 : vector<1x1xf32> to vector<64x1xf32>
    %224 = arith.addf %221, %223 : vector<64x1xf32>
    %225 = vector.shape_cast %224 : vector<64x1xf32> to vector<8x8x1xf32>
    %cst_81 = arith.constant dense<0xFF800000> : vector<8x1xf32>
    %226 = vector.multi_reduction <maximumf>, %225, %cst_81 [0] : vector<8x8x1xf32> to vector<8x1xf32>
    %227 = vector.shape_cast %226 : vector<8x1xf32> to vector<1x8x1xf32>
    %228 = vector.broadcast %227 : vector<1x8x1xf32> to vector<8x8x1xf32>
    %229 = arith.subf %225, %228 : vector<8x8x1xf32>
    %230 = math.exp %229 : vector<8x8x1xf32>
    %cst_82 = arith.constant dense<0.000000e+00> : vector<8x1xf32>
    %231 = vector.multi_reduction <add>, %230, %cst_82 [0] : vector<8x8x1xf32> to vector<8x1xf32>
    %232 = vector.shape_cast %231 : vector<8x1xf32> to vector<1x8x1xf32>
    %233 = tpu.reciprocal %232 {approx = true} : vector<1x8x1xf32> -> vector<1x8x1xf32>
    %234 = vector.broadcast %233 : vector<1x8x1xf32> to vector<8x8x1xf32>
    %235 = arith.mulf %230, %234 : vector<8x8x1xf32>
    %236 = vector.shape_cast %216 : vector<64x32xf32> to vector<8x8x32xf32>
    %237 = vector.broadcast %235 : vector<8x8x1xf32> to vector<8x8x32xf32>
    %238 = arith.mulf %237, %236 : vector<8x8x32xf32>
    %cst_83 = arith.constant dense<0.000000e+00> : vector<8x32xf32>
    %239 = vector.multi_reduction <add>, %238, %cst_83 [0] : vector<8x8x32xf32> to vector<8x32xf32>
    %c0_84 = arith.constant 0 : index
    %c0_85 = arith.constant 0 : index
    %240 = vector.load %arg12[%c0_84, %c0_85] : memref<32x128xf32, #tpu.memory_space<vmem>>, vector<32x128xf32>
    %cst_86 = arith.constant dense<0.000000e+00> : vector<8x128xf32>
    %241 = tpu.matmul %239, %240, %cst_86 {dimension_numbers = #tpu.dot_dimension_numbers<[1], [0], [0], [1], [0, 0, 1, 1], [], []>} : vector<8x32xf32>, vector<32x128xf32>, vector<8x128xf32> -> vector<8x128xf32>
    %c0_87 = arith.constant 0 : index
    %c0_88 = arith.constant 0 : index
    %242 = vector.load %arg13[%c0_87, %c0_88] : memref<1x128xf32, #tpu.memory_space<vmem>>, vector<1x128xf32>
    %243 = vector.broadcast %242 : vector<1x128xf32> to vector<8x128xf32>
    %244 = arith.addf %241, %243 : vector<8x128xf32>
    %c0_89 = arith.constant 0 : index
    %c0_90 = arith.constant 0 : index
    %245 = vector.load %arg14[%c0_89, %c0_90] : memref<8x128xf32, #tpu.memory_space<vmem>>, vector<8x128xf32>
    tpu.vector_store %arg14[%c0_89, %c0_90], %244 {strides = array<i32>} : memref<8x128xf32, #tpu.memory_space<vmem>>, vector<8x128xf32>,
    %c0_91 = arith.constant 0 : index
    %c0_92 = arith.constant 0 : index
    %246 = vector.load %arg15[%c0_91, %c0_92] : memref<8x32xf32, #tpu.memory_space<vmem>>, vector<8x32xf32>
    tpu.vector_store %arg15[%c0_91, %c0_92], %205 {strides = array<i32>} : memref<8x32xf32, #tpu.memory_space<vmem>>, vector<8x32xf32>,
    %c0_93 = arith.constant 0 : index
    %c0_94 = arith.constant 0 : index
    %247 = vector.load %arg16[%c0_93, %c0_94] : memref<8x32xf32, #tpu.memory_space<vmem>>, vector<8x32xf32>
    tpu.vector_store %arg16[%c0_93, %c0_94], %203 {strides = array<i32>} : memref<8x32xf32, #tpu.memory_space<vmem>>, vector<8x32xf32>,
    return
  }
}

</mosaic_0001>

<llo_original>
// kernel: tpu_custom_call.1
$region0: #{tpu_custom_call.1}
  #allocation0 [shape = 'u32[]', space=smem, size = 0x4, offset = 0x4, fixed_abs, tag = 'smem constant byte address 0x4 - core index']
  #allocation1 [shape = 'u32[144,128]{1,0:T(1,128)}', space=vmem, size = 0x12000, scoped, tag = 'internal scratch']
  #allocation2 [shape = 'f32[8,8,128]{2,1,0:T(8,128)}', space=vmem, size = 0x8000, scoped, tag = 'scratch operand']
  #allocation3 [shape = 'f32[8,8,32]{2,1,0:T(8,128)}', space=vmem, size = 0x8000, scoped, tag = 'scratch operand']
  #allocation4 [shape = 'f32[1,1]{1,0:T(1,128)S(1)}', space=vmem, size = 0x200, scoped, tag = 'scoped memory for tpu_custom_call.1']
  %s0 = inlined_call_operand.vmem [shape: f32[64,64], index: 0, kind: input, shape index: {}]
  %s1 = inlined_call_operand.hbm [shape: f32[8,32], index: 1, kind: input, shape index: {}]
  %s2 = inlined_call_operand.hbm [shape: f32[8,32], index: 2, kind: input, shape index: {}]
  %s3 = inlined_call_operand.vmem [shape: f32[64,32], index: 3, kind: input, shape index: {}]
  %s4 = inlined_call_operand.vmem [shape: f32[1,32], index: 4, kind: input, shape index: {}]
  %s5 = inlined_call_operand.vmem [shape: f32[32,128], index: 5, kind: input, shape index: {}]
  %s6 = inlined_call_operand.vmem [shape: f32[1,128], index: 6, kind: input, shape index: {}]
  %s7 = inlined_call_operand.hbm [shape: f32[32,128], index: 7, kind: input, shape index: {}]
  %s8 = inlined_call_operand.hbm [shape: f32[32,32], index: 8, kind: input, shape index: {}]
  %s9 = inlined_call_operand.vmem [shape: f32[1,32], index: 9, kind: input, shape index: {}]
  %s10 = inlined_call_operand.vmem [shape: f32[1,32], index: 10, kind: input, shape index: {}]
  %s11 = inlined_call_operand.<no memory space> [shape: f32[1,1], index: 11, kind: input, shape index: {}]
  %s12 = inlined_call_operand.hbm [shape: f32[32,128], index: 12, kind: input, shape index: {}]
  %s13 = inlined_call_operand.vmem [shape: f32[1,128], index: 13, kind: input, shape index: {}]
  %s14 = inlined_call_operand.hbm [shape: f32[8,128], index: 14, kind: output, shape index: {0}]
  %s15 = inlined_call_operand.hbm [shape: f32[8,32], index: 15, kind: output, shape index: {1}]
  %s16 = inlined_call_operand.hbm [shape: f32[8,32], index: 16, kind: output, shape index: {2}]
  %17 = xla_tuple %s14, %s15, %s16
  %s18 = sld [smem:[#allocation0]]
  $region102: #{tpu_custom_call.1} parent=0
    _
  %s20 = ssub.s32 1, %s18
  %s21 = scalar_select 0, %s20, %s18
  %v22 = vstv %s11
  %23 = vst [vmem:[#allocation4] sm:$0x1] %v22
  $region1: #{tpu_custom_call.1} parent=0
    #allocation5 [shape = 'u8[4096]{0}', space=vmem, size = 0x1000, scoped, tag = 'input window, operand 1, single buffered']
    #allocation6 [shape = 's32[1]{0}', space=sflag, size = 0x4, scoped, tag = 'scoped memory for tpu_custom_call.1']
    #allocation7 [shape = 's32[1]{0}', space=sflag, size = 0x4, scoped, tag = 'scoped memory for tpu_custom_call.1']
    #allocation8 [shape = 'u8[4096]{0}', space=vmem, size = 0x1000, scoped, tag = 'input window, operand 2, single buffered']
    #allocation9 [shape = 's32[1]{0}', space=sflag, size = 0x4, scoped, tag = 'scoped memory for tpu_custom_call.1']
    #allocation10 [shape = 'u8[16384]{0}', space=vmem, size = 0x4000, scoped, tag = 'input window, operand 7, single buffered']
    #allocation11 [shape = 'u8[16384]{0}', space=vmem, size = 0x4000, scoped, tag = 'input window, operand 8, single buffered']
    #allocation12 [shape = 's32[1]{0}', space=sflag, size = 0x4, scoped, tag = 'scoped memory for tpu_custom_call.1']
    #allocation13 [shape = 'u8[16384]{0}', space=vmem, size = 0x4000, scoped, tag = 'input window, operand 12, single buffered']
    #allocation14 [shape = 'u8[4096]{0}', space=vmem, size = 0x1000, scoped, tag = 'output window, operand 0, single buffered']
    #allocation15 [shape = 'u8[4096]{0}', space=vmem, size = 0x1000, scoped, tag = 'output window, operand 1, single buffered']
    #allocation16 [shape = 's32[1]{0}', space=sflag, size = 0x4, scoped, tag = 'scoped memory for tpu_custom_call.1']
    #allocation17 [shape = 'u8[4096]{0}', space=vmem, size = 0x1000, scoped, tag = 'output window, operand 2, single buffered']
    %24 = vsyncpa [#allocation6], 0
    %25 = vsyncpa [#allocation9], 0
    %26 = vsyncpa [#allocation12], 0
    %27 = vsyncpa [#allocation7], 0
    %28 = vsyncpa [#allocation16], 0
    // Predicated region
    $region2: #{tpu_custom_call.1} parent=1 // pred_check
      _
    $region3: #{tpu_custom_call.1} parent=1 // pred_check_branch
      %30 = sbr.rel (0) target = $region5
    $region4: #{tpu_custom_call.1} parent=1 // pred_region
      _
    $region5: #{tpu_custom_call.1} parent=1 // pred_fallthru
      _
    // Predicated region
    $region6: #{tpu_custom_call.1} parent=1 // pred_check
      _
    $region7: #{tpu_custom_call.1} parent=1 // pred_check_branch
      %32 = sbr.rel (0) target = $region9
    $region8: #{tpu_custom_call.1} parent=1 // pred_region
      %s34 = ssub.s32 128, 128
      %35 = vsyncadd [#allocation6], %s34
      %s37 = sshll.u32 [#allocation5], 4
      %s38 = int_to_ptr.vmem [resolvable:$true] %s37
      %40 = dma.hbm_to_vmem [thread:$0]  %s1, 128, %s38, [#allocation6]
    $region9: #{tpu_custom_call.1} parent=1 // pred_fallthru
      _
    // Predicated region
    $region10: #{tpu_custom_call.1} parent=1 // pred_check
      _
    $region11: #{tpu_custom_call.1} parent=1 // pred_check_branch
      %42 = sbr.rel (0) target = $region13
    $region12: #{tpu_custom_call.1} parent=1 // pred_region
      %s44 = ssub.s32 128, 128
      %45 = vsyncadd [#allocation9], %s44
      %s47 = sshll.u32 [#allocation8], 4
      %s48 = int_to_ptr.vmem [resolvable:$true] %s47
      %50 = dma.hbm_to_vmem [thread:$0]  %s2, 128, %s48, [#allocation9]
    $region13: #{tpu_custom_call.1} parent=1 // pred_fallthru
      _
    // Predicated region
    $region14: #{tpu_custom_call.1} parent=1 // pred_check
      _
    $region15: #{tpu_custom_call.1} parent=1 // pred_check_branch
      %52 = sbr.rel (0) target = $region17
    $region16: #{tpu_custom_call.1} parent=1 // pred_region
      _
    $region17: #{tpu_custom_call.1} parent=1 // pred_fallthru
      _
    // Predicated region
    $region18: #{tpu_custom_call.1} parent=1 // pred_check
      _
    $region19: #{tpu_custom_call.1} parent=1 // pred_check_branch
      %54 = sbr.rel (0) target = $region21
    $region20: #{tpu_custom_call.1} parent=1 // pred_region
      _
    $region21: #{tpu_custom_call.1} parent=1 // pred_fallthru
      _
    // Predicated region
    $region22: #{tpu_custom_call.1} parent=1 // pred_check
      _
    $region23: #{tpu_custom_call.1} parent=1 // pred_check_branch
      %56 = sbr.rel (0) target = $region25
    $region24: #{tpu_custom_call.1} parent=1 // pred_region
      _
    $region25: #{tpu_custom_call.1} parent=1 // pred_fallthru
      _
    // Predicated region
    $region26: #{tpu_custom_call.1} parent=1 // pred_check
      _
    $region27: #{tpu_custom_call.1} parent=1 // pred_check_branch
      %58 = sbr.rel (0) target = $region29
    $region28: #{tpu_custom_call.1} parent=1 // pred_region
      _
    $region29: #{tpu_custom_call.1} parent=1 // pred_fallthru
      _
    // Predicated region
    $region30: #{tpu_custom_call.1} parent=1 // pred_check
      _
    $region31: #{tpu_custom_call.1} parent=1 // pred_check_branch
      %60 = sbr.rel (0) target = $region33
    $region32: #{tpu_custom_call.1} parent=1 // pred_region
      %s62 = ssub.s32 512, 512
      %63 = vsyncadd [#allocation9], %s62
      %s64 = sshll.u32 [#allocation10], 4
      %s65 = int_to_ptr.vmem [resolvable:$true] %s64
      %70 = dma.hbm_to_vmem [thread:$0]  %s7, 512, %s65, [#allocation9], 128, 128, 8
    $region33: #{tpu_custom_call.1} parent=1 // pred_fallthru
      _
    // Predicated region
    $region34: #{tpu_custom_call.1} parent=1 // pred_check
      _
    $region35: #{tpu_custom_call.1} parent=1 // pred_check_branch
      %72 = sbr.rel (0) target = $region37
    $region36: #{tpu_custom_call.1} parent=1 // pred_region
      %s74 = ssub.s32 512, 512
      %75 = vsyncadd [#allocation12], %s74
      %s76 = sshll.u32 [#allocation11], 4
      %s77 = int_to_ptr.vmem [resolvable:$true] %s76
      %82 = dma.hbm_to_vmem [thread:$0]  %s8, 512, %s77, [#allocation12], 128, 128, 8
    $region37: #{tpu_custom_call.1} parent=1 // pred_fallthru
      _
    // Predicated region
    $region38: #{tpu_custom_call.1} parent=1 // pred_check
      _
    $region39: #{tpu_custom_call.1} parent=1 // pred_check_branch
      %84 = sbr.rel (0) target = $region41
    $region40: #{tpu_custom_call.1} parent=1 // pred_region
      _
    $region41: #{tpu_custom_call.1} parent=1 // pred_fallthru
      _
    // Predicated region
    $region42: #{tpu_custom_call.1} parent=1 // pred_check
      _
    $region43: #{tpu_custom_call.1} parent=1 // pred_check_branch
      %86 = sbr.rel (0) target = $region45
    $region44: #{tpu_custom_call.1} parent=1 // pred_region
      _
    $region45: #{tpu_custom_call.1} parent=1 // pred_fallthru
      _
    // Predicated region
    $region46: #{tpu_custom_call.1} parent=1 // pred_check
      _
    $region47: #{tpu_custom_call.1} parent=1 // pred_check_branch
      %88 = sbr.rel (0) target = $region49
    $region48: #{tpu_custom_call.1} parent=1 // pred_region
      _
    $region49: #{tpu_custom_call.1} parent=1 // pred_fallthru
      _
    // Predicated region
    $region50: #{tpu_custom_call.1} parent=1 // pred_check
      _
    $region51: #{tpu_custom_call.1} parent=1 // pred_check_branch
      %90 = sbr.rel (0) target = $region53
    $region52: #{tpu_custom_call.1} parent=1 // pred_region
      %s92 = ssub.s32 512, 512
      %93 = vsyncadd [#allocation12], %s92
      %s94 = sshll.u32 [#allocation13], 4
      %s95 = int_to_ptr.vmem [resolvable:$true] %s94
      %100 = dma.hbm_to_vmem [thread:$0]  %s12, 512, %s95, [#allocation12], 128, 128, 8
    $region53: #{tpu_custom_call.1} parent=1 // pred_fallthru
      _
    // Predicated region
    $region54: #{tpu_custom_call.1} parent=1 // pred_check
      _
    $region55: #{tpu_custom_call.1} parent=1 // pred_check_branch
      %102 = sbr.rel (0) target = $region57
    $region56: #{tpu_custom_call.1} parent=1 // pred_region
      _
    $region57: #{tpu_custom_call.1} parent=1 // pred_fallthru
      _
    // Predicated region
    $region58: #{tpu_custom_call.1} parent=1 // pred_check
      _
    $region59: #{tpu_custom_call.1} parent=1 // pred_check_branch
      %104 = sbr.rel (0) target = $region61
    $region60: #{tpu_custom_call.1} parent=1 // pred_region
      %105 = dma.done [#allocation6], 128
    $region61: #{tpu_custom_call.1} parent=1 // pred_fallthru
      _
    // Predicated region
    $region62: #{tpu_custom_call.1} parent=1 // pred_check
      _
    $region63: #{tpu_custom_call.1} parent=1 // pred_check_branch
      %107 = sbr.rel (0) target = $region65
    $region64: #{tpu_custom_call.1} parent=1 // pred_region
      %108 = dma.done [#allocation9], 128
    $region65: #{tpu_custom_call.1} parent=1 // pred_fallthru
      _
    // Predicated region
    $region66: #{tpu_custom_call.1} parent=1 // pred_check
      _
    $region67: #{tpu_custom_call.1} parent=1 // pred_check_branch
      %110 = sbr.rel (0) target = $region69
    $region68: #{tpu_custom_call.1} parent=1 // pred_region
      %111 = dma.done [#allocation9], 512
    $region69: #{tpu_custom_call.1} parent=1 // pred_fallthru
      _
    // Predicated region
    $region70: #{tpu_custom_call.1} parent=1 // pred_check
      _
    $region71: #{tpu_custom_call.1} parent=1 // pred_check_branch
      %113 = sbr.rel (0) target = $region73
    $region72: #{tpu_custom_call.1} parent=1 // pred_region
      %114 = dma.done [#allocation12], 512
    $region73: #{tpu_custom_call.1} parent=1 // pred_fallthru
      _
    // Predicated region
    $region74: #{tpu_custom_call.1} parent=1 // pred_check
      _
    $region75: #{tpu_custom_call.1} parent=1 // pred_check_branch
      %116 = sbr.rel (0) target = $region77
    $region76: #{tpu_custom_call.1} parent=1 // pred_region
      %117 = dma.done [#allocation12], 512
    $region77: #{tpu_custom_call.1} parent=1 // pred_fallthru
      _
    %v118 = vld [vmem:[%s0] sm:$0xff]
    %v119 = vld [vmem:[%s0 + $0x8] sm:$0xff]
    %v120 = vld [vmem:[%s0 + $0x10] sm:$0xff]
    %v121 = vld [vmem:[%s0 + $0x18] sm:$0xff]
    %v122 = vld [vmem:[%s0 + $0x20] sm:$0xff]
    %v123 = vld [vmem:[%s0 + $0x28] sm:$0xff]
    %v124 = vld [vmem:[%s0 + $0x30] sm:$0xff]
    %v125 = vld [vmem:[%s0 + $0x38] sm:$0xff]
    %v126 = vld [vmem:[%s3] sm:$0xff]
    %v127 = vld [vmem:[%s3 + $0x8] sm:$0xff]
    %v128 = vld [vmem:[%s3 + $0x10] sm:$0xff]
    %v129 = vld [vmem:[%s3 + $0x18] sm:$0xff]
    %v130 = vld [vmem:[%s3 + $0x20] sm:$0xff]
    %v131 = vld [vmem:[%s3 + $0x28] sm:$0xff]
    %v132 = vld [vmem:[%s3 + $0x30] sm:$0xff]
    %v133 = vld [vmem:[%s3 + $0x38] sm:$0xff]
    %v134 = vld [vmem:[%s4] sm:$0x1]
    %v136 = vlaneseq
    %v137 = vshrl.u32 %v136, 7
    %v138 = vsub.s32 0, %v137
    %v139 = vrot.slane %v134, %v138
    %vm141 = vcmask 523264
    %v143 = vsel %vm141, %v118, 0
    %v146 = vsel %vm141, %v119, 0
    %v149 = vsel %vm141, %v120, 0
    %v152 = vsel %vm141, %v121, 0
    %v155 = vsel %vm141, %v122, 0
    %v158 = vsel %vm141, %v123, 0
    %v161 = vsel %vm141, %v124, 0
    %v164 = vsel %vm141, %v125, 0
    %166 = vmatprep.subr.mxu0 0.0
    %167 = vmatpush1.msra.mxu0 0.0
    %168 = vmatprep.subr.mxu0 0.0
    %169 = vmatpush1.msra.mxu0 0.0
    %170 = vmatprep.subr.mxu0 0.0
    %171 = vmatpush1.msra.mxu0 0.0
    %172 = vmatprep.subr.mxu0 0.0
    %173 = vmatpush1.msra.mxu0 0.0
    %174 = vmatprep.subr.mxu0 0.0
    %175 = vmatpush1.msra.mxu0 0.0
    %176 = vmatprep.subr.mxu0 0.0
    %177 = vmatpush1.msra.mxu0 0.0
    %178 = vmatprep.subr.mxu0 0.0
    %179 = vmatpush1.msra.mxu0 0.0
    %180 = vmatprep.subr.mxu0 0.0
    %181 = vmatpush1.msra.mxu0 0.0
    %182 = vmatprep.subr.mxu0 0.0
    %183 = vmatpush1.msra.mxu0 %v133
    %184 = vmatprep.subr.mxu0 0.0
    %185 = vmatpush1.msra.mxu0 %v132
    %186 = vmatprep.subr.mxu0 0.0
    %187 = vmatpush1.msra.mxu0 %v131
    %188 = vmatprep.subr.mxu0 0.0
    %189 = vmatpush1.msra.mxu0 %v130
    %190 = vmatprep.subr.mxu0 0.0
    %191 = vmatpush1.msra.mxu0 %v129
    %192 = vmatprep.subr.mxu0 0.0
    %193 = vmatpush1.msra.mxu0 %v128
    %194 = vmatprep.subr.mxu0 0.0
    %195 = vmatpush1.msra.mxu0 %v127
    %196 = vmatprep.subr.mxu0 0.0
    %197 = vmatpush1.msra.mxu0 %v126
    %198 = vmatprep.subr.mxu0 0.0
    %199 = vmatpush2.msra.mxu0 0.0
    %200 = vmatprep.subr.mxu0 0.0
    %201 = vmatpush2.msra.mxu0 0.0
    %202 = vmatprep.subr.mxu0 0.0
    %203 = vmatpush2.msra.mxu0 0.0
    %204 = vmatprep.subr.mxu0 0.0
    %205 = vmatpush2.msra.mxu0 0.0
    %206 = vmatprep.subr.mxu0 0.0
    %207 = vmatpush2.msra.mxu0 0.0
    %208 = vmatprep.subr.mxu0 0.0
    %209 = vmatpush2.msra.mxu0 0.0
    %210 = vmatprep.subr.mxu0 0.0
    %211 = vmatpush2.msra.mxu0 0.0
    %212 = vmatprep.subr.mxu0 0.0
    %213 = vmatpush2.msra.mxu0 0.0
    %214 = vmatprep.subr.mxu0 0.0
    %215 = vmatpush2.msra.mxu0 0.0
    %216 = vmatprep.subr.mxu0 0.0
    %217 = vmatpush2.msra.mxu0 0.0
    %218 = vmatprep.subr.mxu0 0.0
    %219 = vmatpush2.msra.mxu0 0.0
    %220 = vmatprep.subr.mxu0 0.0
    %221 = vmatpush2.msra.mxu0 0.0
    %222 = vmatprep.subr.mxu0 0.0
    %223 = vmatpush2.msra.mxu0 0.0
    %224 = vmatprep.subr.mxu0 0.0
    %225 = vmatpush2.msra.mxu0 0.0
    %226 = vmatprep.subr.mxu0 0.0
    %227 = vmatpush2.msra.mxu0 0.0
    %228 = vmatprep.subr.mxu0 0.0
    %229 = vmatpush2.msra.mxu0 0.0
    %230 = vmatprep.mubr.f32.mxu0 0.0
    %231 = vmatmul.mubr.f32.gmra.mxu0 %v143
    %v232 = vpop.f32.mrf.mxu0
    %v233 = vadd.f32 %v139, %v232
    %v234 = vpop.f32.mrf.mxu0
    %235 = vmatprep.mubr.f32.mxu0 0.0
    %236 = vmatmul.mubr.f32.gmra.mxu0 %v146
    %v237 = vpop.f32.mrf.mxu0
    %v238 = vadd.f32 %v139, %v237
    %v239 = vpop.f32.mrf.mxu0
    %240 = vmatprep.mubr.f32.mxu0 0.0
    %241 = vmatmul.mubr.f32.gmra.mxu0 %v149
    %v242 = vpop.f32.mrf.mxu0
    %v243 = vadd.f32 %v139, %v242
    %v244 = vpop.f32.mrf.mxu0
    %245 = vmatprep.mubr.f32.mxu0 0.0
    %246 = vmatmul.mubr.f32.gmra.mxu0 %v152
    %v247 = vpop.f32.mrf.mxu0
    %v248 = vadd.f32 %v139, %v247
    %v249 = vpop.f32.mrf.mxu0
    %250 = vmatprep.mubr.f32.mxu0 0.0
    %251 = vmatmul.mubr.f32.gmra.mxu0 %v155
    %v252 = vpop.f32.mrf.mxu0
    %v253 = vadd.f32 %v139, %v252
    %v254 = vpop.f32.mrf.mxu0
    %255 = vmatprep.mubr.f32.mxu0 0.0
    %256 = vmatmul.mubr.f32.gmra.mxu0 %v158
    %v257 = vpop.f32.mrf.mxu0
    %v258 = vadd.f32 %v139, %v257
    %v259 = vpop.f32.mrf.mxu0
    %260 = vmatprep.mubr.f32.mxu0 0.0
    %261 = vmatmul.mubr.f32.gmra.mxu0 %v161
    %v262 = vpop.f32.mrf.mxu0
    %v263 = vadd.f32 %v139, %v262
    %v264 = vpop.f32.mrf.mxu0
    %265 = vmatprep.mubr.f32.mxu0 0.0
    %266 = vmatmul.mubr.f32.gmra.mxu0 %v164
    %v267 = vpop.f32.mrf.mxu0
    %v268 = vadd.f32 %v139, %v267
    %v269 = vpop.f32.mrf.mxu0
    %270 = vdwg.mxu0
    %v271 = vmax.f32 %v233, 0.0
    %v272 = vmax.f32 %v238, 0.0
    %v273 = vmax.f32 %v243, 0.0
    %v274 = vmax.f32 %v248, 0.0
    %v275 = vmax.f32 %v253, 0.0
    %v276 = vmax.f32 %v258, 0.0
    %v277 = vmax.f32 %v263, 0.0
    %v278 = vmax.f32 %v268, 0.0
    %v279 = vld [vmem:[%s5] sm:$0xff]
    %v280 = vld [vmem:[%s5 + $0x8] sm:$0xff]
    %v281 = vld [vmem:[%s5 + $0x10] sm:$0xff]
    %v282 = vld [vmem:[%s5 + $0x18] sm:$0xff]
    %v283 = vld [vmem:[%s6] sm:$0x1]
    %v285 = vlaneseq
    %v286 = vshrl.u32 %v285, 7
    %v287 = vsub.s32 0, %v286
    %v288 = vrot.slane %v283, %v287
    %vm290 = vcmask 261120
    %v292 = vsel %vm290, %v271, 0
    %v295 = vsel %vm290, %v272, 0
    %v298 = vsel %vm290, %v273, 0
    %v301 = vsel %vm290, %v274, 0
    %v304 = vsel %vm290, %v275, 0
    %v307 = vsel %vm290, %v276, 0
    %v310 = vsel %vm290, %v277, 0
    %v313 = vsel %vm290, %v278, 0
    %315 = vmatprep.subr.mxu0 0.0
    %316 = vmatpush1.msra.mxu0 0.0
    %317 = vmatprep.subr.mxu0 0.0
    %318 = vmatpush1.msra.mxu0 0.0
    %319 = vmatprep.subr.mxu0 0.0
    %320 = vmatpush1.msra.mxu0 0.0
    %321 = vmatprep.subr.mxu0 0.0
    %322 = vmatpush1.msra.mxu0 0.0
    %323 = vmatprep.subr.mxu0 0.0
    %324 = vmatpush1.msra.mxu0 0.0
    %325 = vmatprep.subr.mxu0 0.0
    %326 = vmatpush1.msra.mxu0 0.0
    %327 = vmatprep.subr.mxu0 0.0
    %328 = vmatpush1.msra.mxu0 0.0
    %329 = vmatprep.subr.mxu0 0.0
    %330 = vmatpush1.msra.mxu0 0.0
    %331 = vmatprep.subr.mxu0 0.0
    %332 = vmatpush1.msra.mxu0 0.0
    %333 = vmatprep.subr.mxu0 0.0
    %334 = vmatpush1.msra.mxu0 0.0
    %335 = vmatprep.subr.mxu0 0.0
    %336 = vmatpush1.msra.mxu0 0.0
    %337 = vmatprep.subr.mxu0 0.0
    %338 = vmatpush1.msra.mxu0 0.0
    %339 = vmatprep.subr.mxu0 0.0
    %340 = vmatpush1.msra.mxu0 %v282
    %341 = vmatprep.subr.mxu0 0.0
    %342 = vmatpush1.msra.mxu0 %v281
    %343 = vmatprep.subr.mxu0 0.0
    %344 = vmatpush1.msra.mxu0 %v280
    %345 = vmatprep.subr.mxu0 0.0
    %346 = vmatpush1.msra.mxu0 %v279
    %347 = vmatprep.subr.mxu0 0.0
    %348 = vmatpush2.msra.mxu0 0.0
    %349 = vmatprep.subr.mxu0 0.0
    %350 = vmatpush2.msra.mxu0 0.0
    %351 = vmatprep.subr.mxu0 0.0
    %352 = vmatpush2.msra.mxu0 0.0
    %353 = vmatprep.subr.mxu0 0.0
    %354 = vmatpush2.msra.mxu0 0.0
    %355 = vmatprep.subr.mxu0 0.0
    %356 = vmatpush2.msra.mxu0 0.0
    %357 = vmatprep.subr.mxu0 0.0
    %358 = vmatpush2.msra.mxu0 0.0
    %359 = vmatprep.subr.mxu0 0.0
    %360 = vmatpush2.msra.mxu0 0.0
    %361 = vmatprep.subr.mxu0 0.0
    %362 = vmatpush2.msra.mxu0 0.0
    %363 = vmatprep.subr.mxu0 0.0
    %364 = vmatpush2.msra.mxu0 0.0
    %365 = vmatprep.subr.mxu0 0.0
    %366 = vmatpush2.msra.mxu0 0.0
    %367 = vmatprep.subr.mxu0 0.0
    %368 = vmatpush2.msra.mxu0 0.0
    %369 = vmatprep.subr.mxu0 0.0
    %370 = vmatpush2.msra.mxu0 0.0
    %371 = vmatprep.subr.mxu0 0.0
    %372 = vmatpush2.msra.mxu0 0.0
    %373 = vmatprep.subr.mxu0 0.0
    %374 = vmatpush2.msra.mxu0 0.0
    %375 = vmatprep.subr.mxu0 0.0
    %376 = vmatpush2.msra.mxu0 0.0
    %377 = vmatprep.subr.mxu0 0.0
    %378 = vmatpush2.msra.mxu0 0.0
    %379 = vmatprep.mubr.f32.mxu0 0.0
    %380 = vmatmul.mubr.f32.gmra.mxu0 %v292
    %v381 = vpop.f32.mrf.mxu0
    %v382 = vadd.f32 %v288, %v381
    %v383 = vpop.f32.mrf.mxu0
    %384 = vmatprep.mubr.f32.mxu0 0.0
    %385 = vmatmul.mubr.f32.gmra.mxu0 %v295
    %v386 = vpop.f32.mrf.mxu0
    %v387 = vadd.f32 %v288, %v386
    %v388 = vpop.f32.mrf.mxu0
    %389 = vmatprep.mubr.f32.mxu0 0.0
    %390 = vmatmul.mubr.f32.gmra.mxu0 %v298
    %v391 = vpop.f32.mrf.mxu0
    %v392 = vadd.f32 %v288, %v391
    %v393 = vpop.f32.mrf.mxu0
    %394 = vmatprep.mubr.f32.mxu0 0.0
    %395 = vmatmul.mubr.f32.gmra.mxu0 %v301
    %v396 = vpop.f32.mrf.mxu0
    %v397 = vadd.f32 %v288, %v396
    %v398 = vpop.f32.mrf.mxu0
    %399 = vmatprep.mubr.f32.mxu0 0.0
    %400 = vmatmul.mubr.f32.gmra.mxu0 %v304
    %v401 = vpop.f32.mrf.mxu0
    %v402 = vadd.f32 %v288, %v401
    %v403 = vpop.f32.mrf.mxu0
    %404 = vmatprep.mubr.f32.mxu0 0.0
    %405 = vmatmul.mubr.f32.gmra.mxu0 %v307
    %v406 = vpop.f32.mrf.mxu0
    %v407 = vadd.f32 %v288, %v406
    %v408 = vpop.f32.mrf.mxu0
    %409 = vmatprep.mubr.f32.mxu0 0.0
    %410 = vmatmul.mubr.f32.gmra.mxu0 %v310
    %v411 = vpop.f32.mrf.mxu0
    %v412 = vadd.f32 %v288, %v411
    %v413 = vpop.f32.mrf.mxu0
    %414 = vmatprep.mubr.f32.mxu0 0.0
    %415 = vmatmul.mubr.f32.gmra.mxu0 %v313
    %v416 = vpop.f32.mrf.mxu0
    %v417 = vadd.f32 %v288, %v416
    %v418 = vpop.f32.mrf.mxu0
    %419 = vdwg.mxu0
    %420 = vst [vmem:[#allocation2] sm:$0xff] %v382
    %421 = vst [vmem:[#allocation2 + $0x8] sm:$0xff] %v387
    %422 = vst [vmem:[#allocation2 + $0x10] sm:$0xff] %v392
    %423 = vst [vmem:[#allocation2 + $0x18] sm:$0xff] %v397
    %424 = vst [vmem:[#allocation2 + $0x20] sm:$0xff] %v402
    %425 = vst [vmem:[#allocation2 + $0x28] sm:$0xff] %v407
    %426 = vst [vmem:[#allocation2 + $0x30] sm:$0xff] %v412
    %427 = vst [vmem:[#allocation2 + $0x38] sm:$0xff] %v417
    %v428 = vld [vmem:[#allocation10] sm:$0xff]
    %v429 = vld [vmem:[#allocation10 + $0x8] sm:$0xff]
    %v430 = vld [vmem:[#allocation10 + $0x10] sm:$0xff]
    %v431 = vld [vmem:[#allocation10 + $0x18] sm:$0xff]
    %v432 = vld [vmem:[#allocation5] sm:$0xff]
    %v433 = vld [vmem:[#allocation8] sm:$0xff]
    %v434 = vld [vmem:[#allocation2] sm:$0xff]
    %v436 = vsel %vm290, %v432, 0
    %438 = vmatprep.subr.mxu0 0.0
    %439 = vmatpush1.msra.mxu0 0.0
    %440 = vmatprep.subr.mxu0 0.0
    %441 = vmatpush1.msra.mxu0 0.0
    %442 = vmatprep.subr.mxu0 0.0
    %443 = vmatpush1.msra.mxu0 0.0
    %444 = vmatprep.subr.mxu0 0.0
    %445 = vmatpush1.msra.mxu0 0.0
    %446 = vmatprep.subr.mxu0 0.0
    %447 = vmatpush1.msra.mxu0 0.0
    %448 = vmatprep.subr.mxu0 0.0
    %449 = vmatpush1.msra.mxu0 0.0
    %450 = vmatprep.subr.mxu0 0.0
    %451 = vmatpush1.msra.mxu0 0.0
    %452 = vmatprep.subr.mxu0 0.0
    %453 = vmatpush1.msra.mxu0 0.0
    %454 = vmatprep.subr.mxu0 0.0
    %455 = vmatpush1.msra.mxu0 0.0
    %456 = vmatprep.subr.mxu0 0.0
    %457 = vmatpush1.msra.mxu0 0.0
    %458 = vmatprep.subr.mxu0 0.0
    %459 = vmatpush1.msra.mxu0 0.0
    %460 = vmatprep.subr.mxu0 0.0
    %461 = vmatpush1.msra.mxu0 0.0
    %462 = vmatprep.subr.mxu0 0.0
    %463 = vmatpush1.msra.mxu0 %v431
    %464 = vmatprep.subr.mxu0 0.0
    %465 = vmatpush1.msra.mxu0 %v430
    %466 = vmatprep.subr.mxu0 0.0
    %467 = vmatpush1.msra.mxu0 %v429
    %468 = vmatprep.subr.mxu0 0.0
    %469 = vmatpush1.msra.mxu0 %v428
    %470 = vmatprep.subr.mxu0 0.0
    %471 = vmatpush2.msra.mxu0 0.0
    %472 = vmatprep.subr.mxu0 0.0
    %473 = vmatpush2.msra.mxu0 0.0
    %474 = vmatprep.subr.mxu0 0.0
    %475 = vmatpush2.msra.mxu0 0.0
    %476 = vmatprep.subr.mxu0 0.0
    %477 = vmatpush2.msra.mxu0 0.0
    %478 = vmatprep.subr.mxu0 0.0
    %479 = vmatpush2.msra.mxu0 0.0
    %480 = vmatprep.subr.mxu0 0.0
    %481 = vmatpush2.msra.mxu0 0.0
    %482 = vmatprep.subr.mxu0 0.0
    %483 = vmatpush2.msra.mxu0 0.0
    %484 = vmatprep.subr.mxu0 0.0
    %485 = vmatpush2.msra.mxu0 0.0
    %486 = vmatprep.subr.mxu0 0.0
    %487 = vmatpush2.msra.mxu0 0.0
    %488 = vmatprep.subr.mxu0 0.0
    %489 = vmatpush2.msra.mxu0 0.0
    %490 = vmatprep.subr.mxu0 0.0
    %491 = vmatpush2.msra.mxu0 0.0
    %492 = vmatprep.subr.mxu0 0.0
    %493 = vmatpush2.msra.mxu0 0.0
    %494 = vmatprep.subr.mxu0 0.0
    %495 = vmatpush2.msra.mxu0 0.0
    %496 = vmatprep.subr.mxu0 0.0
    %497 = vmatpush2.msra.mxu0 0.0
    %498 = vmatprep.subr.mxu0 0.0
    %499 = vmatpush2.msra.mxu0 0.0
    %500 = vmatprep.subr.mxu0 0.0
    %501 = vmatpush2.msra.mxu0 0.0
    %502 = vmatprep.mubr.f32.mxu0 0.0
    %503 = vmatmul.mubr.f32.gmra.mxu0 %v436
    %v504 = vpop.f32.mrf.mxu0
    %v505 = vadd.f32 0.0, %v504
    %v506 = vpop.f32.mrf.mxu0
    %507 = vdwg.mxu0
    %v508 = vadd.f32 %v434, %v505
    %v509 = vxor.u32 %v508, 2147483648
    %v510 = vmul.f32 %v509, 1.442695
    %v511 = vpow.pop %v510
    %v512 = vadd.f32 %v511, 1.0
    %v513 = vrcp.pop %v512
    %v514 = vmul.f32 1.0, %v513
    %v515 = vtanh.pop %v508
    %517 = vrot.lane.b32.xlu0 %v433, 32
    %v518 = vpop.permute.xlu0 %517
    %v520 = vmul.f32 %v514, %v518
    %522 = vrot.lane.b32.xlu0 %v515, 64
    %v523 = vpop.permute.xlu0 %522
    %v525 = vmul.f32 %v514, %v523
    %527 = vrot.lane.b32.xlu0 %v525, 32
    %v528 = vpop.permute.xlu0 %527
    %v530 = vadd.f32 %v520, %v528
    %v531 = vtanh.pop %v530
    %533 = vrot.lane.b32.xlu0 %v531, 64
    %v534 = vpop.permute.xlu0 %533
    %v536 = vmul.f32 %v514, %v534
    %538 = vrot.lane.b32.xlu0 %v536, 32
    %v539 = vpop.permute.xlu0 %538
    %541 = vst.msk [vmem:[#allocation3] sm:$0xff] %vm290, %v539
    %s542 = scalar_lea.vmem [#allocation2], 8
    %v543 = vld [vmem:[%s542] sm:$0xff]
    %v544 = vsel %vm290, %v539, 0
    %546 = vmatprep.subr.mxu0 0.0
    %547 = vmatpush1.msra.mxu0 0.0
    %548 = vmatprep.subr.mxu0 0.0
    %549 = vmatpush1.msra.mxu0 0.0
    %550 = vmatprep.subr.mxu0 0.0
    %551 = vmatpush1.msra.mxu0 0.0
    %552 = vmatprep.subr.mxu0 0.0
    %553 = vmatpush1.msra.mxu0 0.0
    %554 = vmatprep.subr.mxu0 0.0
    %555 = vmatpush1.msra.mxu0 0.0
    %556 = vmatprep.subr.mxu0 0.0
    %557 = vmatpush1.msra.mxu0 0.0
    %558 = vmatprep.subr.mxu0 0.0
    %559 = vmatpush1.msra.mxu0 0.0
    %560 = vmatprep.subr.mxu0 0.0
    %561 = vmatpush1.msra.mxu0 0.0
    %562 = vmatprep.subr.mxu0 0.0
    %563 = vmatpush1.msra.mxu0 0.0
    %564 = vmatprep.subr.mxu0 0.0
    %565 = vmatpush1.msra.mxu0 0.0
    %566 = vmatprep.subr.mxu0 0.0
    %567 = vmatpush1.msra.mxu0 0.0
    %568 = vmatprep.subr.mxu0 0.0
    %569 = vmatpush1.msra.mxu0 0.0
    %570 = vmatprep.subr.mxu0 0.0
    %571 = vmatpush1.msra.mxu0 %v431
    %572 = vmatprep.subr.mxu0 0.0
    %573 = vmatpush1.msra.mxu0 %v430
    %574 = vmatprep.subr.mxu0 0.0
    %575 = vmatpush1.msra.mxu0 %v429
    %576 = vmatprep.subr.mxu0 0.0
    %577 = vmatpush1.msra.mxu0 %v428
    %578 = vmatprep.subr.mxu0 0.0
    %579 = vmatpush2.msra.mxu0 0.0
    %580 = vmatprep.subr.mxu0 0.0
    %581 = vmatpush2.msra.mxu0 0.0
    %582 = vmatprep.subr.mxu0 0.0
    %583 = vmatpush2.msra.mxu0 0.0
    %584 = vmatprep.subr.mxu0 0.0
    %585 = vmatpush2.msra.mxu0 0.0
    %586 = vmatprep.subr.mxu0 0.0
    %587 = vmatpush2.msra.mxu0 0.0
    %588 = vmatprep.subr.mxu0 0.0
    %589 = vmatpush2.msra.mxu0 0.0
    %590 = vmatprep.subr.mxu0 0.0
    %591 = vmatpush2.msra.mxu0 0.0
    %592 = vmatprep.subr.mxu0 0.0
    %593 = vmatpush2.msra.mxu0 0.0
    %594 = vmatprep.subr.mxu0 0.0
    %595 = vmatpush2.msra.mxu0 0.0
    %596 = vmatprep.subr.mxu0 0.0
    %597 = vmatpush2.msra.mxu0 0.0
    %598 = vmatprep.subr.mxu0 0.0
    %599 = vmatpush2.msra.mxu0 0.0
    %600 = vmatprep.subr.mxu0 0.0
    %601 = vmatpush2.msra.mxu0 0.0
    %602 = vmatprep.subr.mxu0 0.0
    %603 = vmatpush2.msra.mxu0 0.0
    %604 = vmatprep.subr.mxu0 0.0
    %605 = vmatpush2.msra.mxu0 0.0
    %606 = vmatprep.subr.mxu0 0.0
    %607 = vmatpush2.msra.mxu0 0.0
    %608 = vmatprep.subr.mxu0 0.0
    %609 = vmatpush2.msra.mxu0 0.0
    %610 = vmatprep.mubr.f32.mxu0 0.0
    %611 = vmatmul.mubr.f32.gmra.mxu0 %v544
    %v612 = vpop.f32.mrf.mxu0
    %v613 = vadd.f32 0.0, %v612
    %v614 = vpop.f32.mrf.mxu0
    %615 = vdwg.mxu0
    %v616 = vadd.f32 %v543, %v613
    %v617 = vxor.u32 %v616, 2147483648
    %v618 = vmul.f32 %v617, 1.442695
    %v619 = vpow.pop %v618
    %v620 = vadd.f32 %v619, 1.0
    %v621 = vrcp.pop %v620
    %v622 = vmul.f32 1.0, %v621
    %v623 = vtanh.pop %v616
    %v624 = vmul.f32 %v622, %v530
    %626 = vrot.lane.b32.xlu0 %v623, 64
    %v627 = vpop.permute.xlu0 %626
    %v629 = vmul.f32 %v622, %v627
    %631 = vrot.lane.b32.xlu0 %v629, 32
    %v632 = vpop.permute.xlu0 %631
    %v634 = vadd.f32 %v624, %v632
    %v635 = vtanh.pop %v634
    %637 = vrot.lane.b32.xlu0 %v635, 64
    %v638 = vpop.permute.xlu0 %637
    %v640 = vmul.f32 %v622, %v638
    %642 = vrot.lane.b32.xlu0 %v640, 32
    %v643 = vpop.permute.xlu0 %642
    %s645 = scalar_lea.vmem [#allocation3], 8
    %646 = vst.msk [vmem:[%s645] sm:$0xff] %vm290, %v643
    %s647 = scalar_lea.vmem [#allocation2], 16
    %v648 = vld [vmem:[%s647] sm:$0xff]
    %v649 = vsel %vm290, %v643, 0
    %651 = vmatprep.subr.mxu0 0.0
    %652 = vmatpush1.msra.mxu0 0.0
    %653 = vmatprep.subr.mxu0 0.0
    %654 = vmatpush1.msra.mxu0 0.0
    %655 = vmatprep.subr.mxu0 0.0
    %656 = vmatpush1.msra.mxu0 0.0
    %657 = vmatprep.subr.mxu0 0.0
    %658 = vmatpush1.msra.mxu0 0.0
    %659 = vmatprep.subr.mxu0 0.0
    %660 = vmatpush1.msra.mxu0 0.0
    %661 = vmatprep.subr.mxu0 0.0
    %662 = vmatpush1.msra.mxu0 0.0
    %663 = vmatprep.subr.mxu0 0.0
    %664 = vmatpush1.msra.mxu0 0.0
    %665 = vmatprep.subr.mxu0 0.0
    %666 = vmatpush1.msra.mxu0 0.0
    %667 = vmatprep.subr.mxu0 0.0
    %668 = vmatpush1.msra.mxu0 0.0
    %669 = vmatprep.subr.mxu0 0.0
    %670 = vmatpush1.msra.mxu0 0.0
    %671 = vmatprep.subr.mxu0 0.0
    %672 = vmatpush1.msra.mxu0 0.0
    %673 = vmatprep.subr.mxu0 0.0
    %674 = vmatpush1.msra.mxu0 0.0
    %675 = vmatprep.subr.mxu0 0.0
    %676 = vmatpush1.msra.mxu0 %v431
    %677 = vmatprep.subr.mxu0 0.0
    %678 = vmatpush1.msra.mxu0 %v430
    %679 = vmatprep.subr.mxu0 0.0
    %680 = vmatpush1.msra.mxu0 %v429
    %681 = vmatprep.subr.mxu0 0.0
    %682 = vmatpush1.msra.mxu0 %v428
    %683 = vmatprep.subr.mxu0 0.0
    %684 = vmatpush2.msra.mxu0 0.0
    %685 = vmatprep.subr.mxu0 0.0
    %686 = vmatpush2.msra.mxu0 0.0
    %687 = vmatprep.subr.mxu0 0.0
    %688 = vmatpush2.msra.mxu0 0.0
    %689 = vmatprep.subr.mxu0 0.0
    %690 = vmatpush2.msra.mxu0 0.0
    %691 = vmatprep.subr.mxu0 0.0
    %692 = vmatpush2.msra.mxu0 0.0
    %693 = vmatprep.subr.mxu0 0.0
    %694 = vmatpush2.msra.mxu0 0.0
    %695 = vmatprep.subr.mxu0 0.0
    %696 = vmatpush2.msra.mxu0 0.0
    %697 = vmatprep.subr.mxu0 0.0
    %698 = vmatpush2.msra.mxu0 0.0
    %699 = vmatprep.subr.mxu0 0.0
    %700 = vmatpush2.msra.mxu0 0.0
    %701 = vmatprep.subr.mxu0 0.0
    %702 = vmatpush2.msra.mxu0 0.0
    %703 = vmatprep.subr.mxu0 0.0
    %704 = vmatpush2.msra.mxu0 0.0
    %705 = vmatprep.subr.mxu0 0.0
    %706 = vmatpush2.msra.mxu0 0.0
    %707 = vmatprep.subr.mxu0 0.0
    %708 = vmatpush2.msra.mxu0 0.0
    %709 = vmatprep.subr.mxu0 0.0
    %710 = vmatpush2.msra.mxu0 0.0
    %711 = vmatprep.subr.mxu0 0.0
    %712 = vmatpush2.msra.mxu0 0.0
    %713 = vmatprep.subr.mxu0 0.0
    %714 = vmatpush2.msra.mxu0 0.0
    %715 = vmatprep.mubr.f32.mxu0 0.0
    %716 = vmatmul.mubr.f32.gmra.mxu0 %v649
    %v717 = vpop.f32.mrf.mxu0
    %v718 = vadd.f32 0.0, %v717
    %v719 = vpop.f32.mrf.mxu0
    %720 = vdwg.mxu0
    %v721 = vadd.f32 %v648, %v718
    %v722 = vxor.u32 %v721, 2147483648
    %v723 = vmul.f32 %v722, 1.442695
    %v724 = vpow.pop %v723
    %v725 = vadd.f32 %v724, 1.0
    %v726 = vrcp.pop %v725
    %v727 = vmul.f32 1.0, %v726
    %v728 = vtanh.pop %v721
    %v729 = vmul.f32 %v727, %v634
    %731 = vrot.lane.b32.xlu0 %v728, 64
    %v732 = vpop.permute.xlu0 %731
    %v734 = vmul.f32 %v727, %v732
    %736 = vrot.lane.b32.xlu0 %v734, 32
    %v737 = vpop.permute.xlu0 %736
    %v739 = vadd.f32 %v729, %v737
    %v740 = vtanh.pop %v739
    %742 = vrot.lane.b32.xlu0 %v740, 64
    %v743 = vpop.permute.xlu0 %742
    %v745 = vmul.f32 %v727, %v743
    %747 = vrot.lane.b32.xlu0 %v745, 32
    %v748 = vpop.permute.xlu0 %747
    %s750 = scalar_lea.vmem [#allocation3], 16
    %751 = vst.msk [vmem:[%s750] sm:$0xff] %vm290, %v748
    %s752 = scalar_lea.vmem [#allocation2], 24
    %v753 = vld [vmem:[%s752] sm:$0xff]
    %v754 = vsel %vm290, %v748, 0
    %756 = vmatprep.subr.mxu0 0.0
    %757 = vmatpush1.msra.mxu0 0.0
    %758 = vmatprep.subr.mxu0 0.0
    %759 = vmatpush1.msra.mxu0 0.0
    %760 = vmatprep.subr.mxu0 0.0
    %761 = vmatpush1.msra.mxu0 0.0
    %762 = vmatprep.subr.mxu0 0.0
    %763 = vmatpush1.msra.mxu0 0.0
    %764 = vmatprep.subr.mxu0 0.0
    %765 = vmatpush1.msra.mxu0 0.0
    %766 = vmatprep.subr.mxu0 0.0
    %767 = vmatpush1.msra.mxu0 0.0
    %768 = vmatprep.subr.mxu0 0.0
    %769 = vmatpush1.msra.mxu0 0.0
    %770 = vmatprep.subr.mxu0 0.0
    %771 = vmatpush1.msra.mxu0 0.0
    %772 = vmatprep.subr.mxu0 0.0
    %773 = vmatpush1.msra.mxu0 0.0
    %774 = vmatprep.subr.mxu0 0.0
    %775 = vmatpush1.msra.mxu0 0.0
    %776 = vmatprep.subr.mxu0 0.0
    %777 = vmatpush1.msra.mxu0 0.0
    %778 = vmatprep.subr.mxu0 0.0
    %779 = vmatpush1.msra.mxu0 0.0
    %780 = vmatprep.subr.mxu0 0.0
    %781 = vmatpush1.msra.mxu0 %v431
    %782 = vmatprep.subr.mxu0 0.0
    %783 = vmatpush1.msra.mxu0 %v430
    %784 = vmatprep.subr.mxu0 0.0
    %785 = vmatpush1.msra.mxu0 %v429
    %786 = vmatprep.subr.mxu0 0.0
    %787 = vmatpush1.msra.mxu0 %v428
    %788 = vmatprep.subr.mxu0 0.0
    %789 = vmatpush2.msra.mxu0 0.0
    %790 = vmatprep.subr.mxu0 0.0
    %791 = vmatpush2.msra.mxu0 0.0
    %792 = vmatprep.subr.mxu0 0.0
    %793 = vmatpush2.msra.mxu0 0.0
    %794 = vmatprep.subr.mxu0 0.0
    %795 = vmatpush2.msra.mxu0 0.0
    %796 = vmatprep.subr.mxu0 0.0
    %797 = vmatpush2.msra.mxu0 0.0
    %798 = vmatprep.subr.mxu0 0.0
    %799 = vmatpush2.msra.mxu0 0.0
    %800 = vmatprep.subr.mxu0 0.0
    %801 = vmatpush2.msra.mxu0 0.0
    %802 = vmatprep.subr.mxu0 0.0
    %803 = vmatpush2.msra.mxu0 0.0
    %804 = vmatprep.subr.mxu0 0.0
    %805 = vmatpush2.msra.mxu0 0.0
    %806 = vmatprep.subr.mxu0 0.0
    %807 = vmatpush2.msra.mxu0 0.0
    %808 = vmatprep.subr.mxu0 0.0
    %809 = vmatpush2.msra.mxu0 0.0
    %810 = vmatprep.subr.mxu0 0.0
    %811 = vmatpush2.msra.mxu0 0.0
    %812 = vmatprep.subr.mxu0 0.0
    %813 = vmatpush2.msra.mxu0 0.0
    %814 = vmatprep.subr.mxu0 0.0
    %815 = vmatpush2.msra.mxu0 0.0
    %816 = vmatprep.subr.mxu0 0.0
    %817 = vmatpush2.msra.mxu0 0.0
    %818 = vmatprep.subr.mxu0 0.0
    %819 = vmatpush2.msra.mxu0 0.0
    %820 = vmatprep.mubr.f32.mxu0 0.0
    %821 = vmatmul.mubr.f32.gmra.mxu0 %v754
    %v822 = vpop.f32.mrf.mxu0
    %v823 = vadd.f32 0.0, %v822
    %v824 = vpop.f32.mrf.mxu0
    %825 = vdwg.mxu0
    %v826 = vadd.f32 %v753, %v823
    %v827 = vxor.u32 %v826, 2147483648
    %v828 = vmul.f32 %v827, 1.442695
    %v829 = vpow.pop %v828
    %v830 = vadd.f32 %v829, 1.0
    %v831 = vrcp.pop %v830
    %v832 = vmul.f32 1.0, %v831
    %v833 = vtanh.pop %v826
    %v834 = vmul.f32 %v832, %v739
    %836 = vrot.lane.b32.xlu0 %v833, 64
    %v837 = vpop.permute.xlu0 %836
    %v839 = vmul.f32 %v832, %v837
    %841 = vrot.lane.b32.xlu0 %v839, 32
    %v842 = vpop.permute.xlu0 %841
    %v844 = vadd.f32 %v834, %v842
    %v845 = vtanh.pop %v844
    %847 = vrot.lane.b32.xlu0 %v845, 64
    %v848 = vpop.permute.xlu0 %847
    %v850 = vmul.f32 %v832, %v848
    %852 = vrot.lane.b32.xlu0 %v850, 32
    %v853 = vpop.permute.xlu0 %852
    %s855 = scalar_lea.vmem [#allocation3], 24
    %856 = vst.msk [vmem:[%s855] sm:$0xff] %vm290, %v853
    %s857 = scalar_lea.vmem [#allocation2], 32
    %v858 = vld [vmem:[%s857] sm:$0xff]
    %v859 = vsel %vm290, %v853, 0
    %861 = vmatprep.subr.mxu0 0.0
    %862 = vmatpush1.msra.mxu0 0.0
    %863 = vmatprep.subr.mxu0 0.0
    %864 = vmatpush1.msra.mxu0 0.0
    %865 = vmatprep.subr.mxu0 0.0
    %866 = vmatpush1.msra.mxu0 0.0
    %867 = vmatprep.subr.mxu0 0.0
    %868 = vmatpush1.msra.mxu0 0.0
    %869 = vmatprep.subr.mxu0 0.0
    %870 = vmatpush1.msra.mxu0 0.0
    %871 = vmatprep.subr.mxu0 0.0
    %872 = vmatpush1.msra.mxu0 0.0
    %873 = vmatprep.subr.mxu0 0.0
    %874 = vmatpush1.msra.mxu0 0.0
    %875 = vmatprep.subr.mxu0 0.0
    %876 = vmatpush1.msra.mxu0 0.0
    %877 = vmatprep.subr.mxu0 0.0
    %878 = vmatpush1.msra.mxu0 0.0
    %879 = vmatprep.subr.mxu0 0.0
    %880 = vmatpush1.msra.mxu0 0.0
    %881 = vmatprep.subr.mxu0 0.0
    %882 = vmatpush1.msra.mxu0 0.0
    %883 = vmatprep.subr.mxu0 0.0
    %884 = vmatpush1.msra.mxu0 0.0
    %885 = vmatprep.subr.mxu0 0.0
    %886 = vmatpush1.msra.mxu0 %v431
    %887 = vmatprep.subr.mxu0 0.0
    %888 = vmatpush1.msra.mxu0 %v430
    %889 = vmatprep.subr.mxu0 0.0
    %890 = vmatpush1.msra.mxu0 %v429
    %891 = vmatprep.subr.mxu0 0.0
    %892 = vmatpush1.msra.mxu0 %v428
    %893 = vmatprep.subr.mxu0 0.0
    %894 = vmatpush2.msra.mxu0 0.0
    %895 = vmatprep.subr.mxu0 0.0
    %896 = vmatpush2.msra.mxu0 0.0
    %897 = vmatprep.subr.mxu0 0.0
    %898 = vmatpush2.msra.mxu0 0.0
    %899 = vmatprep.subr.mxu0 0.0
    %900 = vmatpush2.msra.mxu0 0.0
    %901 = vmatprep.subr.mxu0 0.0
    %902 = vmatpush2.msra.mxu0 0.0
    %903 = vmatprep.subr.mxu0 0.0
    %904 = vmatpush2.msra.mxu0 0.0
    %905 = vmatprep.subr.mxu0 0.0
    %906 = vmatpush2.msra.mxu0 0.0
    %907 = vmatprep.subr.mxu0 0.0
    %908 = vmatpush2.msra.mxu0 0.0
    %909 = vmatprep.subr.mxu0 0.0
    %910 = vmatpush2.msra.mxu0 0.0
    %911 = vmatprep.subr.mxu0 0.0
    %912 = vmatpush2.msra.mxu0 0.0
    %913 = vmatprep.subr.mxu0 0.0
    %914 = vmatpush2.msra.mxu0 0.0
    %915 = vmatprep.subr.mxu0 0.0
    %916 = vmatpush2.msra.mxu0 0.0
    %917 = vmatprep.subr.mxu0 0.0
    %918 = vmatpush2.msra.mxu0 0.0
    %919 = vmatprep.subr.mxu0 0.0
    %920 = vmatpush2.msra.mxu0 0.0
    %921 = vmatprep.subr.mxu0 0.0
    %922 = vmatpush2.msra.mxu0 0.0
    %923 = vmatprep.subr.mxu0 0.0
    %924 = vmatpush2.msra.mxu0 0.0
    %925 = vmatprep.mubr.f32.mxu0 0.0
    %926 = vmatmul.mubr.f32.gmra.mxu0 %v859
    %v927 = vpop.f32.mrf.mxu0
    %v928 = vadd.f32 0.0, %v927
    %v929 = vpop.f32.mrf.mxu0
    %930 = vdwg.mxu0
    %v931 = vadd.f32 %v858, %v928
    %v932 = vxor.u32 %v931, 2147483648
    %v933 = vmul.f32 %v932, 1.442695
    %v934 = vpow.pop %v933
    %v935 = vadd.f32 %v934, 1.0
    %v936 = vrcp.pop %v935
    %v937 = vmul.f32 1.0, %v936
    %v938 = vtanh.pop %v931
    %v939 = vmul.f32 %v937, %v844
    %941 = vrot.lane.b32.xlu0 %v938, 64
    %v942 = vpop.permute.xlu0 %941
    %v944 = vmul.f32 %v937, %v942
    %946 = vrot.lane.b32.xlu0 %v944, 32
    %v947 = vpop.permute.xlu0 %946
    %v949 = vadd.f32 %v939, %v947
    %v950 = vtanh.pop %v949
    %952 = vrot.lane.b32.xlu0 %v950, 64
    %v953 = vpop.permute.xlu0 %952
    %v955 = vmul.f32 %v937, %v953
    %957 = vrot.lane.b32.xlu0 %v955, 32
    %v958 = vpop.permute.xlu0 %957
    %s960 = scalar_lea.vmem [#allocation3], 32
    %961 = vst.msk [vmem:[%s960] sm:$0xff] %vm290, %v958
    %s962 = scalar_lea.vmem [#allocation2], 40
    %v963 = vld [vmem:[%s962] sm:$0xff]
    %v964 = vsel %vm290, %v958, 0
    %966 = vmatprep.subr.mxu0 0.0
    %967 = vmatpush1.msra.mxu0 0.0
    %968 = vmatprep.subr.mxu0 0.0
    %969 = vmatpush1.msra.mxu0 0.0
    %970 = vmatprep.subr.mxu0 0.0
    %971 = vmatpush1.msra.mxu0 0.0
    %972 = vmatprep.subr.mxu0 0.0
    %973 = vmatpush1.msra.mxu0 0.0
    %974 = vmatprep.subr.mxu0 0.0
    %975 = vmatpush1.msra.mxu0 0.0
    %976 = vmatprep.subr.mxu0 0.0
    %977 = vmatpush1.msra.mxu0 0.0
    %978 = vmatprep.subr.mxu0 0.0
    %979 = vmatpush1.msra.mxu0 0.0
    %980 = vmatprep.subr.mxu0 0.0
    %981 = vmatpush1.msra.mxu0 0.0
    %982 = vmatprep.subr.mxu0 0.0
    %983 = vmatpush1.msra.mxu0 0.0
    %984 = vmatprep.subr.mxu0 0.0
    %985 = vmatpush1.msra.mxu0 0.0
    %986 = vmatprep.subr.mxu0 0.0
    %987 = vmatpush1.msra.mxu0 0.0
    %988 = vmatprep.subr.mxu0 0.0
    %989 = vmatpush1.msra.mxu0 0.0
    %990 = vmatprep.subr.mxu0 0.0
    %991 = vmatpush1.msra.mxu0 %v431
    %992 = vmatprep.subr.mxu0 0.0
    %993 = vmatpush1.msra.mxu0 %v430
    %994 = vmatprep.subr.mxu0 0.0
    %995 = vmatpush1.msra.mxu0 %v429
    %996 = vmatprep.subr.mxu0 0.0
    %997 = vmatpush1.msra.mxu0 %v428
    %998 = vmatprep.subr.mxu0 0.0
    %999 = vmatpush2.msra.mxu0 0.0
    %1000 = vmatprep.subr.mxu0 0.0
    %1001 = vmatpush2.msra.mxu0 0.0
    %1002 = vmatprep.subr.mxu0 0.0
    %1003 = vmatpush2.msra.mxu0 0.0
    %1004 = vmatprep.subr.mxu0 0.0
    %1005 = vmatpush2.msra.mxu0 0.0
    %1006 = vmatprep.subr.mxu0 0.0
    %1007 = vmatpush2.msra.mxu0 0.0
    %1008 = vmatprep.subr.mxu0 0.0
    %1009 = vmatpush2.msra.mxu0 0.0
    %1010 = vmatprep.subr.mxu0 0.0
    %1011 = vmatpush2.msra.mxu0 0.0
    %1012 = vmatprep.subr.mxu0 0.0
    %1013 = vmatpush2.msra.mxu0 0.0
    %1014 = vmatprep.subr.mxu0 0.0
    %1015 = vmatpush2.msra.mxu0 0.0
    %1016 = vmatprep.subr.mxu0 0.0
    %1017 = vmatpush2.msra.mxu0 0.0
    %1018 = vmatprep.subr.mxu0 0.0
    %1019 = vmatpush2.msra.mxu0 0.0
    %1020 = vmatprep.subr.mxu0 0.0
    %1021 = vmatpush2.msra.mxu0 0.0
    %1022 = vmatprep.subr.mxu0 0.0
    %1023 = vmatpush2.msra.mxu0 0.0
    %1024 = vmatprep.subr.mxu0 0.0
    %1025 = vmatpush2.msra.mxu0 0.0
    %1026 = vmatprep.subr.mxu0 0.0
    %1027 = vmatpush2.msra.mxu0 0.0
    %1028 = vmatprep.subr.mxu0 0.0
    %1029 = vmatpush2.msra.mxu0 0.0
    %1030 = vmatprep.mubr.f32.mxu0 0.0
    %1031 = vmatmul.mubr.f32.gmra.mxu0 %v964
    %v1032 = vpop.f32.mrf.mxu0
    %v1033 = vadd.f32 0.0, %v1032
    %v1034 = vpop.f32.mrf.mxu0
    %1035 = vdwg.mxu0
    %v1036 = vadd.f32 %v963, %v1033
    %v1037 = vxor.u32 %v1036, 2147483648
    %v1038 = vmul.f32 %v1037, 1.442695
    %v1039 = vpow.pop %v1038
    %v1040 = vadd.f32 %v1039, 1.0
    %v1041 = vrcp.pop %v1040
    %v1042 = vmul.f32 1.0, %v1041
    %v1043 = vtanh.pop %v1036
    %v1044 = vmul.f32 %v1042, %v949
    %1046 = vrot.lane.b32.xlu0 %v1043, 64
    %v1047 = vpop.permute.xlu0 %1046
    %v1049 = vmul.f32 %v1042, %v1047
    %1051 = vrot.lane.b32.xlu0 %v1049, 32
    %v1052 = vpop.permute.xlu0 %1051
    %v1054 = vadd.f32 %v1044, %v1052
    %v1055 = vtanh.pop %v1054
    %1057 = vrot.lane.b32.xlu0 %v1055, 64
    %v1058 = vpop.permute.xlu0 %1057
    %v1060 = vmul.f32 %v1042, %v1058
    %1062 = vrot.lane.b32.xlu0 %v1060, 32
    %v1063 = vpop.permute.xlu0 %1062
    %s1065 = scalar_lea.vmem [#allocation3], 40
    %1066 = vst.msk [vmem:[%s1065] sm:$0xff] %vm290, %v1063
    %s1067 = scalar_lea.vmem [#allocation2], 48
    %v1068 = vld [vmem:[%s1067] sm:$0xff]
    %v1069 = vsel %vm290, %v1063, 0
    %1071 = vmatprep.subr.mxu0 0.0
    %1072 = vmatpush1.msra.mxu0 0.0
    %1073 = vmatprep.subr.mxu0 0.0
    %1074 = vmatpush1.msra.mxu0 0.0
    %1075 = vmatprep.subr.mxu0 0.0
    %1076 = vmatpush1.msra.mxu0 0.0
    %1077 = vmatprep.subr.mxu0 0.0
    %1078 = vmatpush1.msra.mxu0 0.0
    %1079 = vmatprep.subr.mxu0 0.0
    %1080 = vmatpush1.msra.mxu0 0.0
    %1081 = vmatprep.subr.mxu0 0.0
    %1082 = vmatpush1.msra.mxu0 0.0
    %1083 = vmatprep.subr.mxu0 0.0
    %1084 = vmatpush1.msra.mxu0 0.0
    %1085 = vmatprep.subr.mxu0 0.0
    %1086 = vmatpush1.msra.mxu0 0.0
    %1087 = vmatprep.subr.mxu0 0.0
    %1088 = vmatpush1.msra.mxu0 0.0
    %1089 = vmatprep.subr.mxu0 0.0
    %1090 = vmatpush1.msra.mxu0 0.0
    %1091 = vmatprep.subr.mxu0 0.0
    %1092 = vmatpush1.msra.mxu0 0.0
    %1093 = vmatprep.subr.mxu0 0.0
    %1094 = vmatpush1.msra.mxu0 0.0
    %1095 = vmatprep.subr.mxu0 0.0
    %1096 = vmatpush1.msra.mxu0 %v431
    %1097 = vmatprep.subr.mxu0 0.0
    %1098 = vmatpush1.msra.mxu0 %v430
    %1099 = vmatprep.subr.mxu0 0.0
    %1100 = vmatpush1.msra.mxu0 %v429
    %1101 = vmatprep.subr.mxu0 0.0
    %1102 = vmatpush1.msra.mxu0 %v428
    %1103 = vmatprep.subr.mxu0 0.0
    %1104 = vmatpush2.msra.mxu0 0.0
    %1105 = vmatprep.subr.mxu0 0.0
    %1106 = vmatpush2.msra.mxu0 0.0
    %1107 = vmatprep.subr.mxu0 0.0
    %1108 = vmatpush2.msra.mxu0 0.0
    %1109 = vmatprep.subr.mxu0 0.0
    %1110 = vmatpush2.msra.mxu0 0.0
    %1111 = vmatprep.subr.mxu0 0.0
    %1112 = vmatpush2.msra.mxu0 0.0
    %1113 = vmatprep.subr.mxu0 0.0
    %1114 = vmatpush2.msra.mxu0 0.0
    %1115 = vmatprep.subr.mxu0 0.0
    %1116 = vmatpush2.msra.mxu0 0.0
    %1117 = vmatprep.subr.mxu0 0.0
    %1118 = vmatpush2.msra.mxu0 0.0
    %1119 = vmatprep.subr.mxu0 0.0
    %1120 = vmatpush2.msra.mxu0 0.0
    %1121 = vmatprep.subr.mxu0 0.0
    %1122 = vmatpush2.msra.mxu0 0.0
    %1123 = vmatprep.subr.mxu0 0.0
    %1124 = vmatpush2.msra.mxu0 0.0
    %1125 = vmatprep.subr.mxu0 0.0
    %1126 = vmatpush2.msra.mxu0 0.0
    %1127 = vmatprep.subr.mxu0 0.0
    %1128 = vmatpush2.msra.mxu0 0.0
    %1129 = vmatprep.subr.mxu0 0.0
    %1130 = vmatpush2.msra.mxu0 0.0
    %1131 = vmatprep.subr.mxu0 0.0
    %1132 = vmatpush2.msra.mxu0 0.0
    %1133 = vmatprep.subr.mxu0 0.0
    %1134 = vmatpush2.msra.mxu0 0.0
    %1135 = vmatprep.mubr.f32.mxu0 0.0
    %1136 = vmatmul.mubr.f32.gmra.mxu0 %v1069
    %v1137 = vpop.f32.mrf.mxu0
    %v1138 = vadd.f32 0.0, %v1137
    %v1139 = vpop.f32.mrf.mxu0
    %1140 = vdwg.mxu0
    %v1141 = vadd.f32 %v1068, %v1138
    %v1142 = vxor.u32 %v1141, 2147483648
    %v1143 = vmul.f32 %v1142, 1.442695
    %v1144 = vpow.pop %v1143
    %v1145 = vadd.f32 %v1144, 1.0
    %v1146 = vrcp.pop %v1145
    %v1147 = vmul.f32 1.0, %v1146
    %v1148 = vtanh.pop %v1141
    %v1149 = vmul.f32 %v1147, %v1054
    %1151 = vrot.lane.b32.xlu0 %v1148, 64
    %v1152 = vpop.permute.xlu0 %1151
    %v1154 = vmul.f32 %v1147, %v1152
    %1156 = vrot.lane.b32.xlu0 %v1154, 32
    %v1157 = vpop.permute.xlu0 %1156
    %v1159 = vadd.f32 %v1149, %v1157
    %v1160 = vtanh.pop %v1159
    %1162 = vrot.lane.b32.xlu0 %v1160, 64
    %v1163 = vpop.permute.xlu0 %1162
    %v1165 = vmul.f32 %v1147, %v1163
    %1167 = vrot.lane.b32.xlu0 %v1165, 32
    %v1168 = vpop.permute.xlu0 %1167
    %s1170 = scalar_lea.vmem [#allocation3], 48
    %1171 = vst.msk [vmem:[%s1170] sm:$0xff] %vm290, %v1168
    %s1172 = scalar_lea.vmem [#allocation2], 56
    %v1173 = vld [vmem:[%s1172] sm:$0xff]
    %v1174 = vsel %vm290, %v1168, 0
    %1176 = vmatprep.subr.mxu0 0.0
    %1177 = vmatpush1.msra.mxu0 0.0
    %1178 = vmatprep.subr.mxu0 0.0
    %1179 = vmatpush1.msra.mxu0 0.0
    %1180 = vmatprep.subr.mxu0 0.0
    %1181 = vmatpush1.msra.mxu0 0.0
    %1182 = vmatprep.subr.mxu0 0.0
    %1183 = vmatpush1.msra.mxu0 0.0
    %1184 = vmatprep.subr.mxu0 0.0
    %1185 = vmatpush1.msra.mxu0 0.0
    %1186 = vmatprep.subr.mxu0 0.0
    %1187 = vmatpush1.msra.mxu0 0.0
    %1188 = vmatprep.subr.mxu0 0.0
    %1189 = vmatpush1.msra.mxu0 0.0
    %1190 = vmatprep.subr.mxu0 0.0
    %1191 = vmatpush1.msra.mxu0 0.0
    %1192 = vmatprep.subr.mxu0 0.0
    %1193 = vmatpush1.msra.mxu0 0.0
    %1194 = vmatprep.subr.mxu0 0.0
    %1195 = vmatpush1.msra.mxu0 0.0
    %1196 = vmatprep.subr.mxu0 0.0
    %1197 = vmatpush1.msra.mxu0 0.0
    %1198 = vmatprep.subr.mxu0 0.0
    %1199 = vmatpush1.msra.mxu0 0.0
    %1200 = vmatprep.subr.mxu0 0.0
    %1201 = vmatpush1.msra.mxu0 %v431
    %1202 = vmatprep.subr.mxu0 0.0
    %1203 = vmatpush1.msra.mxu0 %v430
    %1204 = vmatprep.subr.mxu0 0.0
    %1205 = vmatpush1.msra.mxu0 %v429
    %1206 = vmatprep.subr.mxu0 0.0
    %1207 = vmatpush1.msra.mxu0 %v428
    %1208 = vmatprep.subr.mxu0 0.0
    %1209 = vmatpush2.msra.mxu0 0.0
    %1210 = vmatprep.subr.mxu0 0.0
    %1211 = vmatpush2.msra.mxu0 0.0
    %1212 = vmatprep.subr.mxu0 0.0
    %1213 = vmatpush2.msra.mxu0 0.0
    %1214 = vmatprep.subr.mxu0 0.0
    %1215 = vmatpush2.msra.mxu0 0.0
    %1216 = vmatprep.subr.mxu0 0.0
    %1217 = vmatpush2.msra.mxu0 0.0
    %1218 = vmatprep.subr.mxu0 0.0
    %1219 = vmatpush2.msra.mxu0 0.0
    %1220 = vmatprep.subr.mxu0 0.0
    %1221 = vmatpush2.msra.mxu0 0.0
    %1222 = vmatprep.subr.mxu0 0.0
    %1223 = vmatpush2.msra.mxu0 0.0
    %1224 = vmatprep.subr.mxu0 0.0
    %1225 = vmatpush2.msra.mxu0 0.0
    %1226 = vmatprep.subr.mxu0 0.0
    %1227 = vmatpush2.msra.mxu0 0.0
    %1228 = vmatprep.subr.mxu0 0.0
    %1229 = vmatpush2.msra.mxu0 0.0
    %1230 = vmatprep.subr.mxu0 0.0
    %1231 = vmatpush2.msra.mxu0 0.0
    %1232 = vmatprep.subr.mxu0 0.0
    %1233 = vmatpush2.msra.mxu0 0.0
    %1234 = vmatprep.subr.mxu0 0.0
    %1235 = vmatpush2.msra.mxu0 0.0
    %1236 = vmatprep.subr.mxu0 0.0
    %1237 = vmatpush2.msra.mxu0 0.0
    %1238 = vmatprep.subr.mxu0 0.0
    %1239 = vmatpush2.msra.mxu0 0.0
    %1240 = vmatprep.mubr.f32.mxu0 0.0
    %1241 = vmatmul.mubr.f32.gmra.mxu0 %v1174
    %v1242 = vpop.f32.mrf.mxu0
    %v1243 = vadd.f32 0.0, %v1242
    %v1244 = vpop.f32.mrf.mxu0
    %1245 = vdwg.mxu0
    %v1246 = vadd.f32 %v1173, %v1243
    %v1247 = vxor.u32 %v1246, 2147483648
    %v1248 = vmul.f32 %v1247, 1.442695
    %v1249 = vpow.pop %v1248
    %v1250 = vadd.f32 %v1249, 1.0
    %v1251 = vrcp.pop %v1250
    %v1252 = vmul.f32 1.0, %v1251
    %v1253 = vtanh.pop %v1246
    %v1254 = vmul.f32 %v1252, %v1159
    %1256 = vrot.lane.b32.xlu0 %v1253, 64
    %v1257 = vpop.permute.xlu0 %1256
    %v1259 = vmul.f32 %v1252, %v1257
    %1261 = vrot.lane.b32.xlu0 %v1259, 32
    %v1262 = vpop.permute.xlu0 %1261
    %v1264 = vadd.f32 %v1254, %v1262
    %v1265 = vtanh.pop %v1264
    %1267 = vrot.lane.b32.xlu0 %v1265, 64
    %v1268 = vpop.permute.xlu0 %1267
    %v1270 = vmul.f32 %v1252, %v1268
    %1272 = vrot.lane.b32.xlu0 %v1270, 32
    %v1273 = vpop.permute.xlu0 %1272
    %s1275 = scalar_lea.vmem [#allocation3], 56
    %1276 = vst.msk [vmem:[%s1275] sm:$0xff] %vm290, %v1273
    %v1277 = vld [vmem:[#allocation3] sm:$0xff]
    %v1278 = vld [vmem:[#allocation3 + $0x8] sm:$0xff]
    %v1279 = vld [vmem:[#allocation3 + $0x10] sm:$0xff]
    %v1280 = vld [vmem:[#allocation3 + $0x18] sm:$0xff]
    %v1281 = vld [vmem:[#allocation3 + $0x20] sm:$0xff]
    %v1282 = vld [vmem:[#allocation3 + $0x28] sm:$0xff]
    %v1283 = vld [vmem:[#allocation3 + $0x30] sm:$0xff]
    %v1284 = vld [vmem:[#allocation3 + $0x38] sm:$0xff]
    %v1285 = vld [vmem:[#allocation11] sm:$0xff]
    %v1286 = vld [vmem:[#allocation11 + $0x8] sm:$0xff]
    %v1287 = vld [vmem:[#allocation11 + $0x10] sm:$0xff]
    %v1288 = vld [vmem:[#allocation11 + $0x18] sm:$0xff]
    %v1289 = vld [vmem:[%s9] sm:$0x1]
    %v1291 = vlaneseq
    %v1292 = vshrl.u32 %v1291, 7
    %v1293 = vsub.s32 0, %v1292
    %v1294 = vrot.slane %v1289, %v1293
    %v1297 = vsel %vm290, %v1277, 0
    %v1300 = vsel %vm290, %v1278, 0
    %v1303 = vsel %vm290, %v1279, 0
    %v1306 = vsel %vm290, %v1280, 0
    %v1309 = vsel %vm290, %v1281, 0
    %v1312 = vsel %vm290, %v1282, 0
    %v1315 = vsel %vm290, %v1283, 0
    %v1318 = vsel %vm290, %v1284, 0
    %1320 = vmatprep.subr.mxu0 0.0
    %1321 = vmatpush1.msra.mxu0 0.0
    %1322 = vmatprep.subr.mxu0 0.0
    %1323 = vmatpush1.msra.mxu0 0.0
    %1324 = vmatprep.subr.mxu0 0.0
    %1325 = vmatpush1.msra.mxu0 0.0
    %1326 = vmatprep.subr.mxu0 0.0
    %1327 = vmatpush1.msra.mxu0 0.0
    %1328 = vmatprep.subr.mxu0 0.0
    %1329 = vmatpush1.msra.mxu0 0.0
    %1330 = vmatprep.subr.mxu0 0.0
    %1331 = vmatpush1.msra.mxu0 0.0
    %1332 = vmatprep.subr.mxu0 0.0
    %1333 = vmatpush1.msra.mxu0 0.0
    %1334 = vmatprep.subr.mxu0 0.0
    %1335 = vmatpush1.msra.mxu0 0.0
    %1336 = vmatprep.subr.mxu0 0.0
    %1337 = vmatpush1.msra.mxu0 0.0
    %1338 = vmatprep.subr.mxu0 0.0
    %1339 = vmatpush1.msra.mxu0 0.0
    %1340 = vmatprep.subr.mxu0 0.0
    %1341 = vmatpush1.msra.mxu0 0.0
    %1342 = vmatprep.subr.mxu0 0.0
    %1343 = vmatpush1.msra.mxu0 0.0
    %1344 = vmatprep.subr.mxu0 0.0
    %1345 = vmatpush1.msra.mxu0 %v1288
    %1346 = vmatprep.subr.mxu0 0.0
    %1347 = vmatpush1.msra.mxu0 %v1287
    %1348 = vmatprep.subr.mxu0 0.0
    %1349 = vmatpush1.msra.mxu0 %v1286
    %1350 = vmatprep.subr.mxu0 0.0
    %1351 = vmatpush1.msra.mxu0 %v1285
    %1352 = vmatprep.subr.mxu0 0.0
    %1353 = vmatpush2.msra.mxu0 0.0
    %1354 = vmatprep.subr.mxu0 0.0
    %1355 = vmatpush2.msra.mxu0 0.0
    %1356 = vmatprep.subr.mxu0 0.0
    %1357 = vmatpush2.msra.mxu0 0.0
    %1358 = vmatprep.subr.mxu0 0.0
    %1359 = vmatpush2.msra.mxu0 0.0
    %1360 = vmatprep.subr.mxu0 0.0
    %1361 = vmatpush2.msra.mxu0 0.0
    %1362 = vmatprep.subr.mxu0 0.0
    %1363 = vmatpush2.msra.mxu0 0.0
    %1364 = vmatprep.subr.mxu0 0.0
    %1365 = vmatpush2.msra.mxu0 0.0
    %1366 = vmatprep.subr.mxu0 0.0
    %1367 = vmatpush2.msra.mxu0 0.0
    %1368 = vmatprep.subr.mxu0 0.0
    %1369 = vmatpush2.msra.mxu0 0.0
    %1370 = vmatprep.subr.mxu0 0.0
    %1371 = vmatpush2.msra.mxu0 0.0
    %1372 = vmatprep.subr.mxu0 0.0
    %1373 = vmatpush2.msra.mxu0 0.0
    %1374 = vmatprep.subr.mxu0 0.0
    %1375 = vmatpush2.msra.mxu0 0.0
    %1376 = vmatprep.subr.mxu0 0.0
    %1377 = vmatpush2.msra.mxu0 0.0
    %1378 = vmatprep.subr.mxu0 0.0
    %1379 = vmatpush2.msra.mxu0 0.0
    %1380 = vmatprep.subr.mxu0 0.0
    %1381 = vmatpush2.msra.mxu0 0.0
    %1382 = vmatprep.subr.mxu0 0.0
    %1383 = vmatpush2.msra.mxu0 0.0
    %1384 = vmatprep.mubr.f32.mxu0 0.0
    %1385 = vmatmul.mubr.f32.gmra.mxu0 %v1297
    %v1386 = vpop.f32.mrf.mxu0
    %v1387 = vadd.f32 %v1294, %v1386
    %v1388 = vpop.f32.mrf.mxu0
    %1389 = vmatprep.mubr.f32.mxu0 0.0
    %1390 = vmatmul.mubr.f32.gmra.mxu0 %v1300
    %v1391 = vpop.f32.mrf.mxu0
    %v1392 = vadd.f32 %v1294, %v1391
    %v1393 = vpop.f32.mrf.mxu0
    %1394 = vmatprep.mubr.f32.mxu0 0.0
    %1395 = vmatmul.mubr.f32.gmra.mxu0 %v1303
    %v1396 = vpop.f32.mrf.mxu0
    %v1397 = vadd.f32 %v1294, %v1396
    %v1398 = vpop.f32.mrf.mxu0
    %1399 = vmatprep.mubr.f32.mxu0 0.0
    %1400 = vmatmul.mubr.f32.gmra.mxu0 %v1306
    %v1401 = vpop.f32.mrf.mxu0
    %v1402 = vadd.f32 %v1294, %v1401
    %v1403 = vpop.f32.mrf.mxu0
    %1404 = vmatprep.mubr.f32.mxu0 0.0
    %1405 = vmatmul.mubr.f32.gmra.mxu0 %v1309
    %v1406 = vpop.f32.mrf.mxu0
    %v1407 = vadd.f32 %v1294, %v1406
    %v1408 = vpop.f32.mrf.mxu0
    %1409 = vmatprep.mubr.f32.mxu0 0.0
    %1410 = vmatmul.mubr.f32.gmra.mxu0 %v1312
    %v1411 = vpop.f32.mrf.mxu0
    %v1412 = vadd.f32 %v1294, %v1411
    %v1413 = vpop.f32.mrf.mxu0
    %1414 = vmatprep.mubr.f32.mxu0 0.0
    %1415 = vmatmul.mubr.f32.gmra.mxu0 %v1315
    %v1416 = vpop.f32.mrf.mxu0
    %v1417 = vadd.f32 %v1294, %v1416
    %v1418 = vpop.f32.mrf.mxu0
    %1419 = vmatprep.mubr.f32.mxu0 0.0
    %1420 = vmatmul.mubr.f32.gmra.mxu0 %v1318
    %v1421 = vpop.f32.mrf.mxu0
    %v1422 = vadd.f32 %v1294, %v1421
    %v1423 = vpop.f32.mrf.mxu0
    %1424 = vdwg.mxu0
    %v1425 = vld [vmem:[%s10] sm:$0x1]
    %v1427 = vlaneseq
    %v1428 = vshrl.u32 %v1427, 7
    %v1429 = vsub.s32 0, %v1428
    %v1430 = vrot.slane %v1425, %v1429
    %v1432 = vmul.f32 %v1387, %v1430
    %v1433 = vmul.f32 %v1392, %v1430
    %v1434 = vmul.f32 %v1397, %v1430
    %v1435 = vmul.f32 %v1402, %v1430
    %v1436 = vmul.f32 %v1407, %v1430
    %v1437 = vmul.f32 %v1412, %v1430
    %v1438 = vmul.f32 %v1417, %v1430
    %v1439 = vmul.f32 %v1422, %v1430
    %v1440 = vsel %vm290, %v1432, 0.0
    %1441 = vadd.xlane.f32.xlu0 %v1440
    %v1442 = vpop.xlane.xlu0 %1441
    %v1443 = vsel %vm290, %v1433, 0.0
    %1444 = vadd.xlane.f32.xlu0 %v1443
    %v1445 = vpop.xlane.xlu0 %1444
    %v1446 = vsel %vm290, %v1434, 0.0
    %1447 = vadd.xlane.f32.xlu0 %v1446
    %v1448 = vpop.xlane.xlu0 %1447
    %v1449 = vsel %vm290, %v1435, 0.0
    %1450 = vadd.xlane.f32.xlu0 %v1449
    %v1451 = vpop.xlane.xlu0 %1450
    %v1452 = vsel %vm290, %v1436, 0.0
    %1453 = vadd.xlane.f32.xlu0 %v1452
    %v1454 = vpop.xlane.xlu0 %1453
    %v1455 = vsel %vm290, %v1437, 0.0
    %1456 = vadd.xlane.f32.xlu0 %v1455
    %v1457 = vpop.xlane.xlu0 %1456
    %v1458 = vsel %vm290, %v1438, 0.0
    %1459 = vadd.xlane.f32.xlu0 %v1458
    %v1460 = vpop.xlane.xlu0 %1459
    %v1461 = vsel %vm290, %v1439, 0.0
    %1462 = vadd.xlane.f32.xlu0 %v1461
    %v1463 = vpop.xlane.xlu0 %1462
    %v1464 = vld [vmem:[#allocation4] sm:$0x1]
    %v1466 = vlaneseq
    %v1467 = vshrl.u32 %v1466, 7
    %v1468 = vsub.s32 0, %v1467
    %v1469 = vrot.slane %v1464, %v1468
    %v1471 = vadd.f32 %v1442, %v1469
    %v1472 = vadd.f32 %v1445, %v1469
    %v1473 = vadd.f32 %v1448, %v1469
    %v1474 = vadd.f32 %v1451, %v1469
    %v1475 = vadd.f32 %v1454, %v1469
    %v1476 = vadd.f32 %v1457, %v1469
    %v1477 = vadd.f32 %v1460, %v1469
    %v1478 = vadd.f32 %v1463, %v1469
    %vm1479 = vcmask 7168
    %v1480 = vsel %vm1479, %v1471, -inf
    %v1481 = vsel %vm1479, %v1472, -inf
    %v1482 = vsel %vm1479, %v1473, -inf
    %v1483 = vsel %vm1479, %v1474, -inf
    %v1484 = vsel %vm1479, %v1475, -inf
    %v1485 = vmax.f32 %v1480, %v1484
    %v1486 = vsel %vm1479, %v1476, -inf
    %v1487 = vmax.f32 %v1481, %v1486
    %v1488 = vsel %vm1479, %v1477, -inf
    %v1489 = vmax.f32 %v1482, %v1488
    %v1490 = vsel %vm1479, %v1478, -inf
    %v1491 = vmax.f32 %v1483, %v1490
    %v1492 = vmax.f32 %v1485, %v1487
    %v1493 = vmax.f32 %v1489, %v1491
    %v1494 = vmax.f32 %v1492, %v1493
    %v1495 = vsub.f32 %v1471, %v1494
    %v1496 = vsub.f32 %v1472, %v1494
    %v1497 = vsub.f32 %v1473, %v1494
    %v1498 = vsub.f32 %v1474, %v1494
    %v1499 = vsub.f32 %v1475, %v1494
    %v1500 = vsub.f32 %v1476, %v1494
    %v1501 = vsub.f32 %v1477, %v1494
    %v1502 = vsub.f32 %v1478, %v1494
    %v1503 = vmul.f32 %v1495, 1.442695
    %v1504 = vpow.pop %v1503
    %v1505 = vmul.f32 %v1496, 1.442695
    %v1506 = vpow.pop %v1505
    %v1507 = vmul.f32 %v1497, 1.442695
    %v1508 = vpow.pop %v1507
    %v1509 = vmul.f32 %v1498, 1.442695
    %v1510 = vpow.pop %v1509
    %v1511 = vmul.f32 %v1499, 1.442695
    %v1512 = vpow.pop %v1511
    %v1513 = vmul.f32 %v1500, 1.442695
    %v1514 = vpow.pop %v1513
    %v1515 = vmul.f32 %v1501, 1.442695
    %v1516 = vpow.pop %v1515
    %v1517 = vmul.f32 %v1502, 1.442695
    %v1518 = vpow.pop %v1517
    %v1519 = vsel %vm1479, %v1504, 0.0
    %v1520 = vsel %vm1479, %v1506, 0.0
    %v1521 = vadd.f32 %v1519, %v1520
    %v1522 = vsel %vm1479, %v1508, 0.0
    %v1523 = vadd.f32 %v1521, %v1522
    %v1524 = vsel %vm1479, %v1510, 0.0
    %v1525 = vadd.f32 %v1523, %v1524
    %v1526 = vsel %vm1479, %v1512, 0.0
    %v1527 = vadd.f32 %v1525, %v1526
    %v1528 = vsel %vm1479, %v1514, 0.0
    %v1529 = vadd.f32 %v1527, %v1528
    %v1530 = vsel %vm1479, %v1516, 0.0
    %v1531 = vadd.f32 %v1529, %v1530
    %v1532 = vsel %vm1479, %v1518, 0.0
    %v1533 = vadd.f32 %v1531, %v1532
    %v1534 = vrcp.pop %v1533
    %v1535 = vmul.f32 %v1504, %v1534
    %v1536 = vmul.f32 %v1506, %v1534
    %v1537 = vmul.f32 %v1508, %v1534
    %v1538 = vmul.f32 %v1510, %v1534
    %v1539 = vmul.f32 %v1512, %v1534
    %v1540 = vmul.f32 %v1514, %v1534
    %v1541 = vmul.f32 %v1516, %v1534
    %v1542 = vmul.f32 %v1518, %v1534
    %1544 = vset.pattern.permute.xlu0 0
    %1545 = vperm.xlu0 %1544, %v1535
    %v1546 = vpop.permute.xlu0 %1545
    %1549 = vset.pattern.permute.xlu0 0
    %1550 = vperm.xlu0 %1549, %v1536
    %v1551 = vpop.permute.xlu0 %1550
    %1554 = vset.pattern.permute.xlu0 0
    %1555 = vperm.xlu0 %1554, %v1537
    %v1556 = vpop.permute.xlu0 %1555
    %1559 = vset.pattern.permute.xlu0 0
    %1560 = vperm.xlu0 %1559, %v1538
    %v1561 = vpop.permute.xlu0 %1560
    %1564 = vset.pattern.permute.xlu0 0
    %1565 = vperm.xlu0 %1564, %v1539
    %v1566 = vpop.permute.xlu0 %1565
    %1569 = vset.pattern.permute.xlu0 0
    %1570 = vperm.xlu0 %1569, %v1540
    %v1571 = vpop.permute.xlu0 %1570
    %1574 = vset.pattern.permute.xlu0 0
    %1575 = vperm.xlu0 %1574, %v1541
    %v1576 = vpop.permute.xlu0 %1575
    %1579 = vset.pattern.permute.xlu0 0
    %1580 = vperm.xlu0 %1579, %v1542
    %v1581 = vpop.permute.xlu0 %1580
    %v1583 = vmul.f32 %v1546, %v1387
    %v1584 = vmul.f32 %v1551, %v1392
    %v1585 = vmul.f32 %v1556, %v1397
    %v1586 = vmul.f32 %v1561, %v1402
    %v1587 = vmul.f32 %v1566, %v1407
    %v1588 = vmul.f32 %v1571, %v1412
    %v1589 = vmul.f32 %v1576, %v1417
    %v1590 = vmul.f32 %v1581, %v1422
    %v1591 = vsel %vm290, %v1583, 0.0
    %v1592 = vsel %vm290, %v1584, 0.0
    %v1593 = vadd.f32 %v1591, %v1592
    %v1594 = vsel %vm290, %v1585, 0.0
    %v1595 = vadd.f32 %v1593, %v1594
    %v1596 = vsel %vm290, %v1586, 0.0
    %v1597 = vadd.f32 %v1595, %v1596
    %v1598 = vsel %vm290, %v1587, 0.0
    %v1599 = vadd.f32 %v1597, %v1598
    %v1600 = vsel %vm290, %v1588, 0.0
    %v1601 = vadd.f32 %v1599, %v1600
    %v1602 = vsel %vm290, %v1589, 0.0
    %v1603 = vadd.f32 %v1601, %v1602
    %v1604 = vsel %vm290, %v1590, 0.0
    %v1605 = vadd.f32 %v1603, %v1604
    %v1606 = vld [vmem:[#allocation13] sm:$0xff]
    %v1607 = vld [vmem:[#allocation13 + $0x8] sm:$0xff]
    %v1608 = vld [vmem:[#allocation13 + $0x10] sm:$0xff]
    %v1609 = vld [vmem:[#allocation13 + $0x18] sm:$0xff]
    %v1610 = vld [vmem:[%s13] sm:$0x1]
    %v1612 = vlaneseq
    %v1613 = vshrl.u32 %v1612, 7
    %v1614 = vsub.s32 0, %v1613
    %v1615 = vrot.slane %v1610, %v1614
    %v1618 = vsel %vm290, %v1605, 0
    %1620 = vmatprep.subr.mxu0 0.0
    %1621 = vmatpush1.msra.mxu0 0.0
    %1622 = vmatprep.subr.mxu0 0.0
    %1623 = vmatpush1.msra.mxu0 0.0
    %1624 = vmatprep.subr.mxu0 0.0
    %1625 = vmatpush1.msra.mxu0 0.0
    %1626 = vmatprep.subr.mxu0 0.0
    %1627 = vmatpush1.msra.mxu0 0.0
    %1628 = vmatprep.subr.mxu0 0.0
    %1629 = vmatpush1.msra.mxu0 0.0
    %1630 = vmatprep.subr.mxu0 0.0
    %1631 = vmatpush1.msra.mxu0 0.0
    %1632 = vmatprep.subr.mxu0 0.0
    %1633 = vmatpush1.msra.mxu0 0.0
    %1634 = vmatprep.subr.mxu0 0.0
    %1635 = vmatpush1.msra.mxu0 0.0
    %1636 = vmatprep.subr.mxu0 0.0
    %1637 = vmatpush1.msra.mxu0 0.0
    %1638 = vmatprep.subr.mxu0 0.0
    %1639 = vmatpush1.msra.mxu0 0.0
    %1640 = vmatprep.subr.mxu0 0.0
    %1641 = vmatpush1.msra.mxu0 0.0
    %1642 = vmatprep.subr.mxu0 0.0
    %1643 = vmatpush1.msra.mxu0 0.0
    %1644 = vmatprep.subr.mxu0 0.0
    %1645 = vmatpush1.msra.mxu0 %v1609
    %1646 = vmatprep.subr.mxu0 0.0
    %1647 = vmatpush1.msra.mxu0 %v1608
    %1648 = vmatprep.subr.mxu0 0.0
    %1649 = vmatpush1.msra.mxu0 %v1607
    %1650 = vmatprep.subr.mxu0 0.0
    %1651 = vmatpush1.msra.mxu0 %v1606
    %1652 = vmatprep.subr.mxu0 0.0
    %1653 = vmatpush2.msra.mxu0 0.0
    %1654 = vmatprep.subr.mxu0 0.0
    %1655 = vmatpush2.msra.mxu0 0.0
    %1656 = vmatprep.subr.mxu0 0.0
    %1657 = vmatpush2.msra.mxu0 0.0
    %1658 = vmatprep.subr.mxu0 0.0
    %1659 = vmatpush2.msra.mxu0 0.0
    %1660 = vmatprep.subr.mxu0 0.0
    %1661 = vmatpush2.msra.mxu0 0.0
    %1662 = vmatprep.subr.mxu0 0.0
    %1663 = vmatpush2.msra.mxu0 0.0
    %1664 = vmatprep.subr.mxu0 0.0
    %1665 = vmatpush2.msra.mxu0 0.0
    %1666 = vmatprep.subr.mxu0 0.0
    %1667 = vmatpush2.msra.mxu0 0.0
    %1668 = vmatprep.subr.mxu0 0.0
    %1669 = vmatpush2.msra.mxu0 0.0
    %1670 = vmatprep.subr.mxu0 0.0
    %1671 = vmatpush2.msra.mxu0 0.0
    %1672 = vmatprep.subr.mxu0 0.0
    %1673 = vmatpush2.msra.mxu0 0.0
    %1674 = vmatprep.subr.mxu0 0.0
    %1675 = vmatpush2.msra.mxu0 0.0
    %1676 = vmatprep.subr.mxu0 0.0
    %1677 = vmatpush2.msra.mxu0 0.0
    %1678 = vmatprep.subr.mxu0 0.0
    %1679 = vmatpush2.msra.mxu0 0.0
    %1680 = vmatprep.subr.mxu0 0.0
    %1681 = vmatpush2.msra.mxu0 0.0
    %1682 = vmatprep.subr.mxu0 0.0
    %1683 = vmatpush2.msra.mxu0 0.0
    %1684 = vmatprep.mubr.f32.mxu0 0.0
    %1685 = vmatmul.mubr.f32.gmra.mxu0 %v1618
    %v1686 = vpop.f32.mrf.mxu0
    %v1687 = vadd.f32 %v1615, %v1686
    %v1688 = vpop.f32.mrf.mxu0
    %1689 = vdwg.mxu0
    %1690 = vst [vmem:[#allocation14] sm:$0xff] %v1687
    %1691 = vst.msk [vmem:[#allocation15] sm:$0xff] %vm290, %v1273
    %1693 = vrot.lane.b32.xlu0 %v1264, 96
    %v1694 = vpop.permute.xlu0 %1693
    %1696 = vst.msk [vmem:[#allocation17] sm:$0xff] %vm290, %v1694
    // Predicated region
    $region78: #{tpu_custom_call.1} parent=1 // pred_check
      _
    $region79: #{tpu_custom_call.1} parent=1 // pred_check_branch
      %1698 = sbr.rel (0) target = $region81
    $region80: #{tpu_custom_call.1} parent=1 // pred_region
      %s1700 = ssub.s32 128, 128
      %1701 = vsyncadd [#allocation7], %s1700
      %s1703 = sshll.u32 [#allocation14], 4
      %s1704 = int_to_ptr.vmem [resolvable:$true] %s1703
      %1706 = dma.vmem_to_hbm [thread:$0]  %s1704, 128, %s14, [#allocation7]
    $region81: #{tpu_custom_call.1} parent=1 // pred_fallthru
      _
    // Predicated region
    $region82: #{tpu_custom_call.1} parent=1 // pred_check
      _
    $region83: #{tpu_custom_call.1} parent=1 // pred_check_branch
      %1708 = sbr.rel (0) target = $region85
    $region84: #{tpu_custom_call.1} parent=1 // pred_region
      %s1710 = ssub.s32 128, 128
      %1711 = vsyncadd [#allocation16], %s1710
      %s1713 = sshll.u32 [#allocation15], 4
      %s1714 = int_to_ptr.vmem [resolvable:$true] %s1713
      %1716 = dma.vmem_to_hbm [thread:$0]  %s1714, 128, %s15, [#allocation16]
    $region85: #{tpu_custom_call.1} parent=1 // pred_fallthru
      _
    // Predicated region
    $region86: #{tpu_custom_call.1} parent=1 // pred_check
      _
    $region87: #{tpu_custom_call.1} parent=1 // pred_check_branch
      %1718 = sbr.rel (0) target = $region89
    $region88: #{tpu_custom_call.1} parent=1 // pred_region
      %s1720 = ssub.s32 128, 128
      %1721 = vsyncadd [#allocation16], %s1720
      %s1723 = sshll.u32 [#allocation17], 4
      %s1724 = int_to_ptr.vmem [resolvable:$true] %s1723
      %1726 = dma.vmem_to_hbm [thread:$0]  %s1724, 128, %s16, [#allocation16]
    $region89: #{tpu_custom_call.1} parent=1 // pred_fallthru
      _
    // Predicated region
    $region90: #{tpu_custom_call.1} parent=1 // pred_check
      _
    $region91: #{tpu_custom_call.1} parent=1 // pred_check_branch
      %1728 = sbr.rel (0) target = $region93
    $region92: #{tpu_custom_call.1} parent=1 // pred_region
      %1729 = dma.done [#allocation7], 128
    $region93: #{tpu_custom_call.1} parent=1 // pred_fallthru
      _
    // Predicated region
    $region94: #{tpu_custom_call.1} parent=1 // pred_check
      _
    $region95: #{tpu_custom_call.1} parent=1 // pred_check_branch
      %1731 = sbr.rel (0) target = $region97
    $region96: #{tpu_custom_call.1} parent=1 // pred_region
      %1732 = dma.done [#allocation16], 128
    $region97: #{tpu_custom_call.1} parent=1 // pred_fallthru
      _
    // Predicated region
    $region98: #{tpu_custom_call.1} parent=1 // pred_check
      _
    $region99: #{tpu_custom_call.1} parent=1 // pred_check_branch
      %1734 = sbr.rel (0) target = $region101
    $region100: #{tpu_custom_call.1} parent=1 // pred_region
      %1735 = dma.done [#allocation16], 128
    $region101: #{tpu_custom_call.1} parent=1 // pred_fallthru
      _
    %1736 = vsyncpa [#allocation6], 1
    %1737 = vsyncpa [#allocation9], 1
    %1738 = vsyncpa [#allocation12], 1
    %1739 = vsyncpa [#allocation7], 1
    %1740 = vsyncpa [#allocation16], 1

</llo_original>
